<compile_context>
chip_gen: v7x
topology: tpu7x:2x2x1
jax: 0.10.0
libtpu: 0.0.40
codegen_flags: <defaults>
</compile_context>

<pallas_src>
import jax
import jax.numpy as jnp
from jax import lax
from jax.experimental import pallas as pl
from jax.experimental.pallas import tpu as pltpu


def uavgnn_kernel(
    # constant (layer-invariant) inputs
    ea_ref,                                # [E, Dep]  bf16 edge features (lane-padded)
    dst_row_ref,                           # [1, E]    i32
    dst_col_ref,                           # [E, 1]    i32
    src_col_ref,                           # [E, 1]    i32
    w1_ref, b1_ref, w2_ref, b2_ref,        # edge_to_node_mlp (weights bf16, biases f32)
    wo1_ref, bo1_ref, wo2_ref, bo2_ref,    # output_mlp (lane-padded)
    # per-layer inputs (pipelined over the layer grid, leading block dim 1)
    we1i_ref,                              # [1, Hp, Hp]   we1 rows acting on x_i (dst)
    we1j_ref,                              # [1, Hp, Hp]   we1 rows acting on x_j (src)
    we1e_ref,                              # [1, Dep, Hp]  we1 rows acting on edge_attr
    be1_ref,                               # [1, 1, Hp]
    we2_ref, be2_ref,                      # [1, Hp, Hp] / [1, 1, Hp]
    wn_ref, bn_ref,                        # [1, Hp, Hp] / [1, 1, Hp]
    # output
    out_ref,                               # [N, out_pad] f32
    # scratch (persists across grid steps)
    nf_ref,                                # [N, Hp]  f32   carried node features
    inv_deg_ref,                           # [N, 1]   f32   carried 1/in-degree
    s_dst_ref,                             # [N, E]   bf16  persisted one-hot scatter (by dst)
    g_cat_ref,                             # [E, 2N]  bf16  persisted fused gather [dst | src]
    p_stack_ref,                           # [2N, Hp] f32   per-layer [p_i; p_j] staging
):
    f32, bf16 = jnp.float32, jnp.bfloat16
    l = pl.program_id(0)
    n_layers = pl.num_programs(0)

    E = ea_ref.shape[0]
    N = out_ref.shape[0]

    def dense(x, w, b=None):
        # bf16 operands + f32 accumulation: full-rate MXU path on v5e/v6e/v7x.
        acc = jnp.dot(x.astype(bf16), w.astype(bf16), preferred_element_type=f32)
        return acc if b is None else acc + b

    ea = ea_ref[...]

    # ---- step 0: build+persist one-hots, degree, edge_to_node_mlp + scatter-ADD ----
    @pl.when(l == 0)
    def _init():
        # One-hot scatter [N,E] (by dst) and fused gather [E,2N] = [by-dst | by-src].
        # Built ONCE here and persisted in bf16 scratch (0/1 is exact in bf16), so
        # every later grid step is free of iota/compare VPU work.  The f32 compare
        # result is reused for the degree row-reduce before the one-time bf16 cast.
        row_iota = lax.broadcasted_iota(jnp.int32, (N, E), 0)
        s_dst_f32 = (row_iota == dst_row_ref[...]).astype(f32)
        s_dst_ref[...] = s_dst_f32.astype(bf16)
        col2 = lax.broadcasted_iota(jnp.int32, (E, 2 * N), 1)
        g_cat_ref[...] = ((col2 == dst_col_ref[...]) |
                          (col2 == (src_col_ref[...] + N))).astype(f32).astype(bf16)

        # Degree via an XLU row-reduce (free slot beside the MXU).  1/deg is exact:
        # deg is a small integer computed once, so approx reciprocal buys nothing.
        deg = jnp.sum(s_dst_f32, axis=1, keepdims=True)               # [N, 1]
        inv_deg_ref[...] = jnp.where(deg > 0.0, 1.0 / jnp.maximum(deg, 1.0), 0.0)

        # edge_to_node_mlp, then scatter-add into the node features.
        h = jnp.maximum(dense(ea, w1_ref[...], b1_ref[...]), 0.0)
        em = dense(h, w2_ref[...], b2_ref[...])                       # [E, Hp]
        nf_ref[...] = jnp.dot(s_dst_ref[...], em.astype(bf16),
                              preferred_element_type=f32)             # [N, Hp]

    # ---- message-passing layer l (torch_geometric aggr='mean') ----
    nf = nf_ref[...]                                                  # [N, Hp] f32
    # Reassociated projection: project node features once per layer with the x_i /
    # x_j halves of we1 into the two (8-sublane-aligned) halves of a [2N, Hp]
    # scratch; ONE fused one-hot matmul over the 2N contraction then gives
    # x_i@We1_i + x_j@We1_j per edge.
    p_stack_ref[pl.ds(0, N), :] = dense(nf, we1i_ref[0])              # x_i projection
    p_stack_ref[pl.ds(N, N), :] = dense(nf, we1j_ref[0])              # x_j projection
    gathered = jnp.dot(g_cat_ref[...], p_stack_ref[...].astype(bf16),
                       preferred_element_type=f32)                    # [E, Hp]
    m = jnp.maximum(gathered + dense(ea, we1e_ref[0], be1_ref[0]), 0.0)
    msg = dense(m, we2_ref[0], be2_ref[0])                            # [E, Hp]
    aggr = (jnp.dot(s_dst_ref[...], msg.astype(bf16),
                    preferred_element_type=f32) * inv_deg_ref[...])   # mean aggregation
    new_nf = jnp.maximum(dense(aggr, wn_ref[0], bn_ref[0]), 0.0)
    nf_ref[...] = new_nf

    # ---- last step: output MLP (lane-dense padded output) ----
    @pl.when(l == n_layers - 1)
    def _final():
        # NOTE: out_ref has a constant index_map over the layer grid; it is written
        # only here and flushed once at the end (single final writeback per block).
        o = jnp.maximum(dense(new_nf, wo1_ref[...], bo1_ref[...]), 0.0)
        out_ref[...] = dense(o, wo2_ref[...], bo2_ref[...])


def _vmem_limit_bytes(N, E, Hp, Dep, out_pad):
    f32b, bf16b = 4, 2
    one_hots = (N * E + 2 * N * E) * bf16b                 # persisted scatter + gather
    stacked = 2 * N * Hp * f32b                            # [p_i; p_j] staging
    carried = N * (Hp + 1) * f32b                          # node features + 1/deg
    edge_act = E * (Dep + 6 * Hp) * f32b                   # per-layer edge temporaries
    node_act = N * (4 * Hp + out_pad) * f32b
    const_w = ((E * Dep + Dep * Hp + 2 * Hp * Hp + Hp * out_pad) * bf16b
               + (4 * Hp + out_pad) * f32b + 3 * E * 4)
    layer_w = 2 * ((4 * Hp * Hp + Dep * Hp) * bf16b + 4 * Hp * f32b)  # double-buffered
    total = one_hots + stacked + carried + edge_act + node_act + const_w + layer_w
    # Generation-aware cap: ~25% headroom of physical VMEM (v7x: 64 MiB/TC -> ~48 MiB,
    # v5e/v6e: 128 MiB -> ~96 MiB).  Generous 4x factor for compiler temporaries.
    try:
        cap = int(0.75 * pltpu.get_tpu_info().vmem_capacity_bytes)
    except Exception:
        cap = 96 * 1024 * 1024
    return int(min(max(4 * total, 16 * 1024 * 1024), cap))


def uavgnn_forward(x, edge_index, edge_attr, params, num_layers):
    assert num_layers >= 1
    N = x.shape[0]                       # x values are unused by the module
    E, De = edge_attr.shape
    H = params["w1"].shape[1]
    out_dim = params["wo2"].shape[1]
    L = num_layers

    def rup(v):
        return max(128, ((v + 127) // 128) * 128)

    Hp, Dep, out_pad = rup(H), rup(De), rup(out_dim)
    f32, bf16 = jnp.float32, jnp.bfloat16

    src = edge_index[0].astype(jnp.int32)
    dst = edge_index[1].astype(jnp.int32)

    def pad(a, *shape):
        return jnp.pad(a, [(0, s - d) for d, s in zip(a.shape, shape)])

    # ---- layout plumbing (outside the kernel): lane-pad to 128, pre-cast weights ----
    we1 = params["we1"]                                   # [L, 2H+De, H]
    we1_i = pad(we1[:, :H, :], L, Hp, Hp).astype(bf16)
    we1_j = pad(we1[:, H:2 * H, :], L, Hp, Hp).astype(bf16)
    we1_e = pad(we1[:, 2 * H:, :], L, Dep, Hp).astype(bf16)

    const_args = (
        pad(edge_attr, E, Dep).astype(bf16),
        dst.reshape(1, E), dst.reshape(E, 1), src.reshape(E, 1),
        pad(params["w1"], Dep, Hp).astype(bf16), pad(params["b1"], 1, Hp),
        pad(params["w2"], Hp, Hp).astype(bf16), pad(params["b2"], 1, Hp),
        pad(params["wo1"], Hp, Hp).astype(bf16), pad(params["bo1"], 1, Hp),
        pad(params["wo2"], Hp, out_pad).astype(bf16), pad(params["bo2"], 1, out_pad),
    )
    layer_args = (
        we1_i, we1_j, we1_e, pad(params["be1"], L, 1, Hp),
        pad(params["we2"], L, Hp, Hp).astype(bf16), pad(params["be2"], L, 1, Hp),
        pad(params["wn"], L, Hp, Hp).astype(bf16), pad(params["bn"], L, 1, Hp),
    )

    def const_spec(a):
        nd = a.ndim
        return pl.BlockSpec(a.shape, lambda l, _n=nd: (0,) * _n)

    def layer_spec(a):
        nd = a.ndim
        return pl.BlockSpec((1,) + a.shape[1:],
                            lambda l, _n=nd: (l,) + (0,) * (_n - 1))

    grid_spec = pltpu.PrefetchScalarGridSpec(
        num_scalar_prefetch=0,
        grid=(num_layers,),
        in_specs=[const_spec(a) for a in const_args]
                 + [layer_spec(a) for a in layer_args],
        out_specs=pl.BlockSpec((N, out_pad), lambda l: (0, 0)),
        scratch_shapes=[
            pltpu.VMEM((N, Hp), f32),        # node features (carried across layers)
            pltpu.VMEM((N, 1), f32),         # 1/deg
            pltpu.VMEM((N, E), bf16),        # persisted one-hot scatter (by dst)
            pltpu.VMEM((E, 2 * N), bf16),    # persisted fused gather [dst | src]
            pltpu.VMEM((2 * N, Hp), f32),    # stacked [p_i; p_j] staging
        ],
    )

    out_padded = pl.pallas_call(
        uavgnn_kernel,
        out_shape=jax.ShapeDtypeStruct((N, out_pad), f32),
        grid_spec=grid_spec,
        compiler_params=pltpu.CompilerParams(
            dimension_semantics=("arbitrary",),
            vmem_limit_bytes=_vmem_limit_bytes(N, E, Hp, Dep, out_pad)),
    )(*const_args, *layer_args)
    return out_padded[:, :out_dim]


def uavgnn_reference(x, edge_index, edge_attr, params, num_layers):
    """Plain-JAX f32 reference mirroring the PyTorch forward pass."""
    relu = jax.nn.relu
    src, dst = edge_index[0], edge_index[1]
    N = x.shape[0]
    em = relu(edge_attr @ params["w1"] + params["b1"]) @ params["w2"] + params["b2"]
    H = em.shape[1]
    nf = jnp.zeros((N, H), jnp.float32).at[dst].add(em)
    deg = jnp.zeros((N, 1), jnp.float32).at[dst].add(1.0)
    for l in range(num_layers):
        feat = jnp.concatenate([nf[dst], nf[src], edge_attr], axis=-1)
        msg = (relu(feat @ params["we1"][l] + params["be1"][l])
               @ params["we2"][l] + params["be2"][l])
        summ = jnp.zeros((N, H), jnp.float32).at[dst].add(msg)
        aggr = jnp.where(deg > 0.0, summ / jnp.maximum(deg, 1.0), 0.0)
        nf = relu(aggr @ params["wn"][l] + params["bn"][l])
    return relu(nf @ params["wo1"] + params["bo1"]) @ params["wo2"] + params["bo2"]


def init_params(key, edge_dim, hidden_dim, output_dim, num_layers):
    ks = iter(jax.random.split(key, 32))

    def w(shape, scale=0.1):
        return jax.random.normal(next(ks), shape, jnp.float32) * scale

    H = hidden_dim
    return dict(
        w1=w((edge_dim, H)), b1=w((1, H), 0.01),
        w2=w((H, H)),        b2=w((1, H), 0.01),
        we1=w((num_layers, 2 * H + edge_dim, H)), be1=w((num_layers, 1, H), 0.01),
        we2=w((num_layers, H, H)),                be2=w((num_layers, 1, H), 0.01),
        wn=w((num_layers, H, H)),                 bn=w((num_layers, 1, H), 0.01),
        wo1=w((H, H)),          bo1=w((1, H), 0.01),
        wo2=w((H, output_dim)), bo2=w((1, output_dim), 0.01),
    )


if __name__ == "__main__":
    # Small, module-consistent shapes.
    num_nodes, num_edges = 8, 16
    node_dim, edge_dim, hidden_dim, output_dim, num_layers = 6, 32, 32, 8, 2
    assert edge_dim == hidden_dim  # required for the original module to run

    key = jax.random.PRNGKey(0)
    kx, kei, kea, kp = jax.random.split(key, 4)

    x = jax.random.normal(kx, (num_nodes, node_dim), jnp.float32)     # values unused
    edge_index = jax.random.randint(kei, (2, num_edges), 0, num_nodes, jnp.int32)
    edge_attr = jax.random.normal(kea, (num_edges, edge_dim), jnp.float32)
    params = init_params(kp, edge_dim, hidden_dim, output_dim, num_layers)

    out = uavgnn_forward(x, edge_index, edge_attr, params, num_layers)
    out = jax.block_until_ready(out)

    ref = uavgnn_reference(x, edge_index, edge_attr, params, num_layers)
    assert out.shape == (num_nodes, output_dim)
    # bf16 MXU operands (weights + scatter/gather path) vs. f32 reference
    assert jnp.allclose(out, ref, rtol=2e-2, atol=2e-2), "mismatch vs JAX reference"

    print("KERNEL_OK")
</pallas_src>

<mosaic_0001>
module attributes {stable_mosaic.version = 11 : i64} {
  func.func @uavgnn_kernel(%arg0: i32, %arg1: memref<16x128xbf16, #tpu.memory_space<vmem>>, %arg2: memref<1x16xi32, #tpu.memory_space<vmem>>, %arg3: memref<16x1xi32, #tpu.memory_space<vmem>>, %arg4: memref<16x1xi32, #tpu.memory_space<vmem>>, %arg5: memref<128x128xbf16, #tpu.memory_space<vmem>>, %arg6: memref<1x128xf32, #tpu.memory_space<vmem>>, %arg7: memref<128x128xbf16, #tpu.memory_space<vmem>>, %arg8: memref<1x128xf32, #tpu.memory_space<vmem>>, %arg9: memref<128x128xbf16, #tpu.memory_space<vmem>>, %arg10: memref<1x128xf32, #tpu.memory_space<vmem>>, %arg11: memref<128x128xbf16, #tpu.memory_space<vmem>>, %arg12: memref<1x128xf32, #tpu.memory_space<vmem>>, %arg13: memref<1x128x128xbf16, #tpu.memory_space<vmem>>, %arg14: memref<1x128x128xbf16, #tpu.memory_space<vmem>>, %arg15: memref<1x128x128xbf16, #tpu.memory_space<vmem>>, %arg16: memref<1x1x128xf32, #tpu.memory_space<vmem>>, %arg17: memref<1x128x128xbf16, #tpu.memory_space<vmem>>, %arg18: memref<1x1x128xf32, #tpu.memory_space<vmem>>, %arg19: memref<1x128x128xbf16, #tpu.memory_space<vmem>>, %arg20: memref<1x1x128xf32, #tpu.memory_space<vmem>>, %arg21: memref<8x128xf32, #tpu.memory_space<vmem>>, %arg22: memref<8x128xf32, #tpu.memory_space<vmem>>, %arg23: memref<8x1xf32, #tpu.memory_space<vmem>>, %arg24: memref<8x16xbf16, #tpu.memory_space<vmem>>, %arg25: memref<16x16xbf16, #tpu.memory_space<vmem>>, %arg26: memref<16x128xf32, #tpu.memory_space<vmem>>) attributes {dimension_semantics = [#tpu.dimension_semantics<arbitrary>], iteration_bounds = array<i64: 2>, scalar_prefetch = 0 : i64, scratch_operands = 5 : i64, tpu.core_type = #tpu.core_type<tc>, window_params = [{pipeline_mode = #tpu.pipeline_mode<synchronous>, transform_indices = @transform_0, window_bounds = array<i64: 16, 128>}, {pipeline_mode = #tpu.pipeline_mode<synchronous>, transform_indices = @transform_1, window_bounds = array<i64: 1, 16>}, {pipeline_mode = #tpu.pipeline_mode<synchronous>, transform_indices = @transform_2, window_bounds = array<i64: 16, 1>}, {pipeline_mode = #tpu.pipeline_mode<synchronous>, transform_indices = @transform_3, window_bounds = array<i64: 16, 1>}, {pipeline_mode = #tpu.pipeline_mode<synchronous>, transform_indices = @transform_4, window_bounds = array<i64: 128, 128>}, {pipeline_mode = #tpu.pipeline_mode<synchronous>, transform_indices = @transform_5, window_bounds = array<i64: 1, 128>}, {pipeline_mode = #tpu.pipeline_mode<synchronous>, transform_indices = @transform_6, window_bounds = array<i64: 128, 128>}, {pipeline_mode = #tpu.pipeline_mode<synchronous>, transform_indices = @transform_7, window_bounds = array<i64: 1, 128>}, {pipeline_mode = #tpu.pipeline_mode<synchronous>, transform_indices = @transform_8, window_bounds = array<i64: 128, 128>}, {pipeline_mode = #tpu.pipeline_mode<synchronous>, transform_indices = @transform_9, window_bounds = array<i64: 1, 128>}, {pipeline_mode = #tpu.pipeline_mode<synchronous>, transform_indices = @transform_10, window_bounds = array<i64: 128, 128>}, {pipeline_mode = #tpu.pipeline_mode<synchronous>, transform_indices = @transform_11, window_bounds = array<i64: 1, 128>}, {transform_indices = @transform_12, window_bounds = array<i64: 1, 128, 128>}, {transform_indices = @transform_13, window_bounds = array<i64: 1, 128, 128>}, {transform_indices = @transform_14, window_bounds = array<i64: 1, 128, 128>}, {transform_indices = @transform_15, window_bounds = array<i64: 1, 1, 128>}, {transform_indices = @transform_16, window_bounds = array<i64: 1, 128, 128>}, {transform_indices = @transform_17, window_bounds = array<i64: 1, 1, 128>}, {transform_indices = @transform_18, window_bounds = array<i64: 1, 128, 128>}, {transform_indices = @transform_19, window_bounds = array<i64: 1, 1, 128>}, {pipeline_mode = #tpu.pipeline_mode<synchronous>, transform_indices = @transform_20, window_bounds = array<i64: 8, 128>}]} {
    %c0 = arith.constant 0 : index
    %c0_0 = arith.constant 0 : index
    %0 = vector.load %arg1[%c0, %c0_0] : memref<16x128xbf16, #tpu.memory_space<vmem>>, vector<16x128xbf16>
    %c0_i32 = arith.constant 0 : i32
    %1 = arith.cmpi eq, %arg0, %c0_i32 : i32
    %2 = arith.extui %1 : i1 to i32
    %c0_i32_1 = arith.constant 0 : i32
    %3 = arith.cmpi ne, %2, %c0_i32_1 : i32
    scf.if %3 {
      %57 = tpu.iota {dimensions = array<i32: 0>} : vector<8x16xi32>
      %c0_50 = arith.constant 0 : index
      %c0_51 = arith.constant 0 : index
      %58 = vector.load %arg2[%c0_50, %c0_51] : memref<1x16xi32, #tpu.memory_space<vmem>>, vector<1x16xi32>
      %59 = vector.broadcast %58 : vector<1x16xi32> to vector<8x16xi32>
      %60 = arith.cmpi eq, %57, %59 : vector<8x16xi32>
      %61 = arith.extui %60 : vector<8x16xi1> to vector<8x16xi32>
      %62 = arith.sitofp %61 : vector<8x16xi32> to vector<8x16xf32>
      %63 = arith.truncf %62 : vector<8x16xf32> to vector<8x16xbf16>
      %c0_52 = arith.constant 0 : index
      %c0_53 = arith.constant 0 : index
      %64 = vector.load %arg24[%c0_52, %c0_53] : memref<8x16xbf16, #tpu.memory_space<vmem>>, vector<8x16xbf16>
      tpu.vector_store %arg24[%c0_52, %c0_53], %63 {strides = array<i32>} : memref<8x16xbf16, #tpu.memory_space<vmem>>, vector<8x16xbf16>,
      %65 = tpu.iota {dimensions = array<i32: 1>} : vector<16x16xi32>
      %c0_54 = arith.constant 0 : index
      %c0_55 = arith.constant 0 : index
      %66 = vector.load %arg3[%c0_54, %c0_55] : memref<16x1xi32, #tpu.memory_space<vmem>>, vector<16x1xi32>
      %67 = vector.broadcast %66 : vector<16x1xi32> to vector<16x16xi32>
      %68 = arith.cmpi eq, %65, %67 : vector<16x16xi32>
      %c0_56 = arith.constant 0 : index
      %c0_57 = arith.constant 0 : index
      %69 = vector.load %arg4[%c0_56, %c0_57] : memref<16x1xi32, #tpu.memory_space<vmem>>, vector<16x1xi32>
      %c8_i32 = arith.constant 8 : i32
      %70 = vector.broadcast %c8_i32 : i32 to vector<16x1xi32>
      %71 = arith.addi %69, %70 : vector<16x1xi32>
      %72 = vector.broadcast %71 : vector<16x1xi32> to vector<16x16xi32>
      %73 = arith.cmpi eq, %65, %72 : vector<16x16xi32>
      %74 = arith.ori %68, %73 : vector<16x16xi1>
      %75 = arith.extui %74 : vector<16x16xi1> to vector<16x16xi32>
      %76 = arith.sitofp %75 : vector<16x16xi32> to vector<16x16xf32>
      %77 = arith.truncf %76 : vector<16x16xf32> to vector<16x16xbf16>
      %c0_58 = arith.constant 0 : index
      %c0_59 = arith.constant 0 : index
      %78 = vector.load %arg25[%c0_58, %c0_59] : memref<16x16xbf16, #tpu.memory_space<vmem>>, vector<16x16xbf16>
      tpu.vector_store %arg25[%c0_58, %c0_59], %77 {strides = array<i32>} : memref<16x16xbf16, #tpu.memory_space<vmem>>, vector<16x16xbf16>,
      %cst_60 = arith.constant dense<0.000000e+00> : vector<8xf32>
      %79 = vector.multi_reduction <add>, %62, %cst_60 [1] : vector<8x16xf32> to vector<8xf32>
      %80 = vector.shape_cast %79 : vector<8xf32> to vector<8x1xf32>
      %cst_61 = arith.constant 0.000000e+00 : f32
      %81 = vector.broadcast %cst_61 : f32 to vector<8x1xf32>
      %82 = arith.cmpf ogt, %80, %81 : vector<8x1xf32>
      %cst_62 = arith.constant 1.000000e+00 : f32
      %83 = vector.broadcast %cst_62 : f32 to vector<8x1xf32>
      %84 = arith.maximumf %80, %83 : vector<8x1xf32>
      %cst_63 = arith.constant 1.000000e+00 : f32
      %85 = vector.broadcast %cst_63 : f32 to vector<8x1xf32>
      %86 = arith.divf %85, %84 : vector<8x1xf32>
      %cst_64 = arith.constant 0.000000e+00 : f32
      %87 = vector.broadcast %cst_64 : f32 to vector<8x1xf32>
      %88 = arith.select %82, %86, %87 : vector<8x1xi1>, vector<8x1xf32>
      %c0_65 = arith.constant 0 : index
      %c0_66 = arith.constant 0 : index
      %89 = vector.load %arg23[%c0_65, %c0_66] : memref<8x1xf32, #tpu.memory_space<vmem>>, vector<8x1xf32>
      tpu.vector_store %arg23[%c0_65, %c0_66], %88 {strides = array<i32>} : memref<8x1xf32, #tpu.memory_space<vmem>>, vector<8x1xf32>,
      %c0_67 = arith.constant 0 : index
      %c0_68 = arith.constant 0 : index
      %90 = vector.load %arg5[%c0_67, %c0_68] : memref<128x128xbf16, #tpu.memory_space<vmem>>, vector<128x128xbf16>
      %c0_69 = arith.constant 0 : index
      %c0_70 = arith.constant 0 : index
      %91 = vector.load %arg6[%c0_69, %c0_70] : memref<1x128xf32, #tpu.memory_space<vmem>>, vector<1x128xf32>
      %cst_71 = arith.constant dense<0.000000e+00> : vector<16x128xf32>
      %92 = tpu.matmul %0, %90, %cst_71 {dimension_numbers = #tpu.dot_dimension_numbers<[1], [0], [0], [1], [0, 0, 1, 1], [], []>} : vector<16x128xbf16>, vector<128x128xbf16>, vector<16x128xf32> -> vector<16x128xf32>
      %93 = vector.broadcast %91 : vector<1x128xf32> to vector<16x128xf32>
      %94 = arith.addf %92, %93 : vector<16x128xf32>
      %cst_72 = arith.constant 0.000000e+00 : f32
      %95 = vector.broadcast %cst_72 : f32 to vector<16x128xf32>
      %96 = arith.maximumf %94, %95 : vector<16x128xf32>
      %c0_73 = arith.constant 0 : index
      %c0_74 = arith.constant 0 : index
      %97 = vector.load %arg7[%c0_73, %c0_74] : memref<128x128xbf16, #tpu.memory_space<vmem>>, vector<128x128xbf16>
      %c0_75 = arith.constant 0 : index
      %c0_76 = arith.constant 0 : index
      %98 = vector.load %arg8[%c0_75, %c0_76] : memref<1x128xf32, #tpu.memory_space<vmem>>, vector<1x128xf32>
      %99 = arith.truncf %96 : vector<16x128xf32> to vector<16x128xbf16>
      %cst_77 = arith.constant dense<0.000000e+00> : vector<16x128xf32>
      %100 = tpu.matmul %99, %97, %cst_77 {dimension_numbers = #tpu.dot_dimension_numbers<[1], [0], [0], [1], [0, 0, 1, 1], [], []>} : vector<16x128xbf16>, vector<128x128xbf16>, vector<16x128xf32> -> vector<16x128xf32>
      %101 = vector.broadcast %98 : vector<1x128xf32> to vector<16x128xf32>
      %102 = arith.addf %100, %101 : vector<16x128xf32>
      %c0_78 = arith.constant 0 : index
      %c0_79 = arith.constant 0 : index
      %103 = vector.load %arg24[%c0_78, %c0_79] : memref<8x16xbf16, #tpu.memory_space<vmem>>, vector<8x16xbf16>
      %104 = arith.truncf %102 : vector<16x128xf32> to vector<16x128xbf16>
      %cst_80 = arith.constant dense<0.000000e+00> : vector<8x128xf32>
      %105 = tpu.matmul %103, %104, %cst_80 {dimension_numbers = #tpu.dot_dimension_numbers<[1], [0], [0], [1], [0, 0, 1, 1], [], []>} : vector<8x16xbf16>, vector<16x128xbf16>, vector<8x128xf32> -> vector<8x128xf32>
      %c0_81 = arith.constant 0 : index
      %c0_82 = arith.constant 0 : index
      %106 = vector.load %arg22[%c0_81, %c0_82] : memref<8x128xf32, #tpu.memory_space<vmem>>, vector<8x128xf32>
      tpu.vector_store %arg22[%c0_81, %c0_82], %105 {strides = array<i32>} : memref<8x128xf32, #tpu.memory_space<vmem>>, vector<8x128xf32>,
    } else {
    }
    %c0_2 = arith.constant 0 : index
    %c0_3 = arith.constant 0 : index
    %4 = vector.load %arg22[%c0_2, %c0_3] : memref<8x128xf32, #tpu.memory_space<vmem>>, vector<8x128xf32>
    %c0_4 = arith.constant 0 : index
    %c0_5 = arith.constant 0 : index
    %c0_6 = arith.constant 0 : index
    %5 = vector.load %arg13[%c0_4, %c0_5, %c0_6] : memref<1x128x128xbf16, #tpu.memory_space<vmem>>, vector<1x128x128xbf16>
    %6 = vector.shape_cast %5 : vector<1x128x128xbf16> to vector<128x128xbf16>
    %7 = arith.truncf %4 : vector<8x128xf32> to vector<8x128xbf16>
    %cst = arith.constant dense<0.000000e+00> : vector<8x128xf32>
    %8 = tpu.matmul %7, %6, %cst {dimension_numbers = #tpu.dot_dimension_numbers<[1], [0], [0], [1], [0, 0, 1, 1], [], []>} : vector<8x128xbf16>, vector<128x128xbf16>, vector<8x128xf32> -> vector<8x128xf32>
    %c0_7 = arith.constant 0 : index
    %c0_8 = arith.constant 0 : index
    %9 = vector.load %arg26[%c0_7, %c0_8] : memref<16x128xf32, #tpu.memory_space<vmem>>, vector<8x128xf32>
    tpu.vector_store %arg26[%c0_7, %c0_8], %8 {strides = array<i32>} : memref<16x128xf32, #tpu.memory_space<vmem>>, vector<8x128xf32>,
    %c0_9 = arith.constant 0 : index
    %c0_10 = arith.constant 0 : index
    %c0_11 = arith.constant 0 : index
    %10 = vector.load %arg14[%c0_9, %c0_10, %c0_11] : memref<1x128x128xbf16, #tpu.memory_space<vmem>>, vector<1x128x128xbf16>
    %11 = vector.shape_cast %10 : vector<1x128x128xbf16> to vector<128x128xbf16>
    %12 = arith.truncf %4 : vector<8x128xf32> to vector<8x128xbf16>
    %cst_12 = arith.constant dense<0.000000e+00> : vector<8x128xf32>
    %13 = tpu.matmul %12, %11, %cst_12 {dimension_numbers = #tpu.dot_dimension_numbers<[1], [0], [0], [1], [0, 0, 1, 1], [], []>} : vector<8x128xbf16>, vector<128x128xbf16>, vector<8x128xf32> -> vector<8x128xf32>
    %c8 = arith.constant 8 : index
    %c0_13 = arith.constant 0 : index
    %14 = vector.load %arg26[%c8, %c0_13] : memref<16x128xf32, #tpu.memory_space<vmem>>, vector<8x128xf32>
    tpu.vector_store %arg26[%c8, %c0_13], %13 {strides = array<i32>} : memref<16x128xf32, #tpu.memory_space<vmem>>, vector<8x128xf32>,
    %c0_14 = arith.constant 0 : index
    %c0_15 = arith.constant 0 : index
    %15 = vector.load %arg25[%c0_14, %c0_15] : memref<16x16xbf16, #tpu.memory_space<vmem>>, vector<16x16xbf16>
    %c0_16 = arith.constant 0 : index
    %c0_17 = arith.constant 0 : index
    %16 = vector.load %arg26[%c0_16, %c0_17] : memref<16x128xf32, #tpu.memory_space<vmem>>, vector<16x128xf32>
    %17 = arith.truncf %16 : vector<16x128xf32> to vector<16x128xbf16>
    %cst_18 = arith.constant dense<0.000000e+00> : vector<16x128xf32>
    %18 = tpu.matmul %15, %17, %cst_18 {dimension_numbers = #tpu.dot_dimension_numbers<[1], [0], [0], [1], [0, 0, 1, 1], [], []>} : vector<16x16xbf16>, vector<16x128xbf16>, vector<16x128xf32> -> vector<16x128xf32>
    %c0_19 = arith.constant 0 : index
    %c0_20 = arith.constant 0 : index
    %c0_21 = arith.constant 0 : index
    %19 = vector.load %arg15[%c0_19, %c0_20, %c0_21] : memref<1x128x128xbf16, #tpu.memory_space<vmem>>, vector<1x128x128xbf16>
    %20 = vector.shape_cast %19 : vector<1x128x128xbf16> to vector<128x128xbf16>
    %c0_22 = arith.constant 0 : index
    %c0_23 = arith.constant 0 : index
    %c0_24 = arith.constant 0 : index
    %21 = vector.load %arg16[%c0_22, %c0_23, %c0_24] : memref<1x1x128xf32, #tpu.memory_space<vmem>>, vector<1x1x128xf32>
    %22 = vector.shape_cast %21 : vector<1x1x128xf32> to vector<1x128xf32>
    %cst_25 = arith.constant dense<0.000000e+00> : vector<16x128xf32>
    %23 = tpu.matmul %0, %20, %cst_25 {dimension_numbers = #tpu.dot_dimension_numbers<[1], [0], [0], [1], [0, 0, 1, 1], [], []>} : vector<16x128xbf16>, vector<128x128xbf16>, vector<16x128xf32> -> vector<16x128xf32>
    %24 = vector.broadcast %22 : vector<1x128xf32> to vector<16x128xf32>
    %25 = arith.addf %23, %24 : vector<16x128xf32>
    %26 = arith.addf %18, %25 : vector<16x128xf32>
    %cst_26 = arith.constant 0.000000e+00 : f32
    %27 = vector.broadcast %cst_26 : f32 to vector<16x128xf32>
    %28 = arith.maximumf %26, %27 : vector<16x128xf32>
    %c0_27 = arith.constant 0 : index
    %c0_28 = arith.constant 0 : index
    %c0_29 = arith.constant 0 : index
    %29 = vector.load %arg17[%c0_27, %c0_28, %c0_29] : memref<1x128x128xbf16, #tpu.memory_space<vmem>>, vector<1x128x128xbf16>
    %30 = vector.shape_cast %29 : vector<1x128x128xbf16> to vector<128x128xbf16>
    %c0_30 = arith.constant 0 : index
    %c0_31 = arith.constant 0 : index
    %c0_32 = arith.constant 0 : index
    %31 = vector.load %arg18[%c0_30, %c0_31, %c0_32] : memref<1x1x128xf32, #tpu.memory_space<vmem>>, vector<1x1x128xf32>
    %32 = vector.shape_cast %31 : vector<1x1x128xf32> to vector<1x128xf32>
    %33 = arith.truncf %28 : vector<16x128xf32> to vector<16x128xbf16>
    %cst_33 = arith.constant dense<0.000000e+00> : vector<16x128xf32>
    %34 = tpu.matmul %33, %30, %cst_33 {dimension_numbers = #tpu.dot_dimension_numbers<[1], [0], [0], [1], [0, 0, 1, 1], [], []>} : vector<16x128xbf16>, vector<128x128xbf16>, vector<16x128xf32> -> vector<16x128xf32>
    %35 = vector.broadcast %32 : vector<1x128xf32> to vector<16x128xf32>
    %36 = arith.addf %34, %35 : vector<16x128xf32>
    %c0_34 = arith.constant 0 : index
    %c0_35 = arith.constant 0 : index
    %37 = vector.load %arg24[%c0_34, %c0_35] : memref<8x16xbf16, #tpu.memory_space<vmem>>, vector<8x16xbf16>
    %38 = arith.truncf %36 : vector<16x128xf32> to vector<16x128xbf16>
    %cst_36 = arith.constant dense<0.000000e+00> : vector<8x128xf32>
    %39 = tpu.matmul %37, %38, %cst_36 {dimension_numbers = #tpu.dot_dimension_numbers<[1], [0], [0], [1], [0, 0, 1, 1], [], []>} : vector<8x16xbf16>, vector<16x128xbf16>, vector<8x128xf32> -> vector<8x128xf32>
    %c0_37 = arith.constant 0 : index
    %c0_38 = arith.constant 0 : index
    %40 = vector.load %arg23[%c0_37, %c0_38] : memref<8x1xf32, #tpu.memory_space<vmem>>, vector<8x1xf32>
    %41 = vector.broadcast %40 : vector<8x1xf32> to vector<8x128xf32>
    %42 = arith.mulf %39, %41 : vector<8x128xf32>
    %c0_39 = arith.constant 0 : index
    %c0_40 = arith.constant 0 : index
    %c0_41 = arith.constant 0 : index
    %43 = vector.load %arg19[%c0_39, %c0_40, %c0_41] : memref<1x128x128xbf16, #tpu.memory_space<vmem>>, vector<1x128x128xbf16>
    %44 = vector.shape_cast %43 : vector<1x128x128xbf16> to vector<128x128xbf16>
    %c0_42 = arith.constant 0 : index
    %c0_43 = arith.constant 0 : index
    %c0_44 = arith.constant 0 : index
    %45 = vector.load %arg20[%c0_42, %c0_43, %c0_44] : memref<1x1x128xf32, #tpu.memory_space<vmem>>, vector<1x1x128xf32>
    %46 = vector.shape_cast %45 : vector<1x1x128xf32> to vector<1x128xf32>
    %47 = arith.truncf %42 : vector<8x128xf32> to vector<8x128xbf16>
    %cst_45 = arith.constant dense<0.000000e+00> : vector<8x128xf32>
    %48 = tpu.matmul %47, %44, %cst_45 {dimension_numbers = #tpu.dot_dimension_numbers<[1], [0], [0], [1], [0, 0, 1, 1], [], []>} : vector<8x128xbf16>, vector<128x128xbf16>, vector<8x128xf32> -> vector<8x128xf32>
    %49 = vector.broadcast %46 : vector<1x128xf32> to vector<8x128xf32>
    %50 = arith.addf %48, %49 : vector<8x128xf32>
    %cst_46 = arith.constant 0.000000e+00 : f32
    %51 = vector.broadcast %cst_46 : f32 to vector<8x128xf32>
    %52 = arith.maximumf %50, %51 : vector<8x128xf32>
    %c0_47 = arith.constant 0 : index
    %c0_48 = arith.constant 0 : index
    %53 = vector.load %arg22[%c0_47, %c0_48] : memref<8x128xf32, #tpu.memory_space<vmem>>, vector<8x128xf32>
    tpu.vector_store %arg22[%c0_47, %c0_48], %52 {strides = array<i32>} : memref<8x128xf32, #tpu.memory_space<vmem>>, vector<8x128xf32>,
    %c1_i32 = arith.constant 1 : i32
    %54 = arith.cmpi eq, %arg0, %c1_i32 : i32
    %55 = arith.extui %54 : i1 to i32
    %c0_i32_49 = arith.constant 0 : i32
    %56 = arith.cmpi ne, %55, %c0_i32_49 : i32
    scf.if %56 {
      %c0_50 = arith.constant 0 : index
      %c0_51 = arith.constant 0 : index
      %57 = vector.load %arg9[%c0_50, %c0_51] : memref<128x128xbf16, #tpu.memory_space<vmem>>, vector<128x128xbf16>
      %c0_52 = arith.constant 0 : index
      %c0_53 = arith.constant 0 : index
      %58 = vector.load %arg10[%c0_52, %c0_53] : memref<1x128xf32, #tpu.memory_space<vmem>>, vector<1x128xf32>
      %59 = arith.truncf %52 : vector<8x128xf32> to vector<8x128xbf16>
      %cst_54 = arith.constant dense<0.000000e+00> : vector<8x128xf32>
      %60 = tpu.matmul %59, %57, %cst_54 {dimension_numbers = #tpu.dot_dimension_numbers<[1], [0], [0], [1], [0, 0, 1, 1], [], []>} : vector<8x128xbf16>, vector<128x128xbf16>, vector<8x128xf32> -> vector<8x128xf32>
      %61 = vector.broadcast %58 : vector<1x128xf32> to vector<8x128xf32>
      %62 = arith.addf %60, %61 : vector<8x128xf32>
      %cst_55 = arith.constant 0.000000e+00 : f32
      %63 = vector.broadcast %cst_55 : f32 to vector<8x128xf32>
      %64 = arith.maximumf %62, %63 : vector<8x128xf32>
      %c0_56 = arith.constant 0 : index
      %c0_57 = arith.constant 0 : index
      %65 = vector.load %arg11[%c0_56, %c0_57] : memref<128x128xbf16, #tpu.memory_space<vmem>>, vector<128x128xbf16>
      %c0_58 = arith.constant 0 : index
      %c0_59 = arith.constant 0 : index
      %66 = vector.load %arg12[%c0_58, %c0_59] : memref<1x128xf32, #tpu.memory_space<vmem>>, vector<1x128xf32>
      %67 = arith.truncf %64 : vector<8x128xf32> to vector<8x128xbf16>
      %cst_60 = arith.constant dense<0.000000e+00> : vector<8x128xf32>
      %68 = tpu.matmul %67, %65, %cst_60 {dimension_numbers = #tpu.dot_dimension_numbers<[1], [0], [0], [1], [0, 0, 1, 1], [], []>} : vector<8x128xbf16>, vector<128x128xbf16>, vector<8x128xf32> -> vector<8x128xf32>
      %69 = vector.broadcast %66 : vector<1x128xf32> to vector<8x128xf32>
      %70 = arith.addf %68, %69 : vector<8x128xf32>
      %c0_61 = arith.constant 0 : index
      %c0_62 = arith.constant 0 : index
      %71 = vector.load %arg21[%c0_61, %c0_62] : memref<8x128xf32, #tpu.memory_space<vmem>>, vector<8x128xf32>
      tpu.vector_store %arg21[%c0_61, %c0_62], %70 {strides = array<i32>} : memref<8x128xf32, #tpu.memory_space<vmem>>, vector<8x128xf32>,
    } else {
    }
    return
  }
  func.func @transform_0(%arg0: i32) -> (i32, i32) {
    %c0_i32 = arith.constant 0 : i32
    %c0_i32_0 = arith.constant 0 : i32
    %c0_i32_1 = arith.constant 0 : i32
    return %c0_i32, %c0_i32_0 : i32, i32
  }
  func.func @transform_1(%arg0: i32) -> (i32, i32) {
    %c0_i32 = arith.constant 0 : i32
    %c0_i32_0 = arith.constant 0 : i32
    %c0_i32_1 = arith.constant 0 : i32
    return %c0_i32, %c0_i32_0 : i32, i32
  }
  func.func @transform_2(%arg0: i32) -> (i32, i32) {
    %c0_i32 = arith.constant 0 : i32
    %c0_i32_0 = arith.constant 0 : i32
    %c0_i32_1 = arith.constant 0 : i32
    return %c0_i32, %c0_i32_0 : i32, i32
  }
  func.func @transform_3(%arg0: i32) -> (i32, i32) {
    %c0_i32 = arith.constant 0 : i32
    %c0_i32_0 = arith.constant 0 : i32
    %c0_i32_1 = arith.constant 0 : i32
    return %c0_i32, %c0_i32_0 : i32, i32
  }
  func.func @transform_4(%arg0: i32) -> (i32, i32) {
    %c0_i32 = arith.constant 0 : i32
    %c0_i32_0 = arith.constant 0 : i32
    %c0_i32_1 = arith.constant 0 : i32
    return %c0_i32, %c0_i32_0 : i32, i32
  }
  func.func @transform_5(%arg0: i32) -> (i32, i32) {
    %c0_i32 = arith.constant 0 : i32
    %c0_i32_0 = arith.constant 0 : i32
    %c0_i32_1 = arith.constant 0 : i32
    return %c0_i32, %c0_i32_0 : i32, i32
  }
  func.func @transform_6(%arg0: i32) -> (i32, i32) {
    %c0_i32 = arith.constant 0 : i32
    %c0_i32_0 = arith.constant 0 : i32
    %c0_i32_1 = arith.constant 0 : i32
    return %c0_i32, %c0_i32_0 : i32, i32
  }
  func.func @transform_7(%arg0: i32) -> (i32, i32) {
    %c0_i32 = arith.constant 0 : i32
    %c0_i32_0 = arith.constant 0 : i32
    %c0_i32_1 = arith.constant 0 : i32
    return %c0_i32, %c0_i32_0 : i32, i32
  }
  func.func @transform_8(%arg0: i32) -> (i32, i32) {
    %c0_i32 = arith.constant 0 : i32
    %c0_i32_0 = arith.constant 0 : i32
    %c0_i32_1 = arith.constant 0 : i32
    return %c0_i32, %c0_i32_0 : i32, i32
  }
  func.func @transform_9(%arg0: i32) -> (i32, i32) {
    %c0_i32 = arith.constant 0 : i32
    %c0_i32_0 = arith.constant 0 : i32
    %c0_i32_1 = arith.constant 0 : i32
    return %c0_i32, %c0_i32_0 : i32, i32
  }
  func.func @transform_10(%arg0: i32) -> (i32, i32) {
    %c0_i32 = arith.constant 0 : i32
    %c0_i32_0 = arith.constant 0 : i32
    %c0_i32_1 = arith.constant 0 : i32
    return %c0_i32, %c0_i32_0 : i32, i32
  }
  func.func @transform_11(%arg0: i32) -> (i32, i32) {
    %c0_i32 = arith.constant 0 : i32
    %c0_i32_0 = arith.constant 0 : i32
    %c0_i32_1 = arith.constant 0 : i32
    return %c0_i32, %c0_i32_0 : i32, i32
  }
  func.func @transform_12(%arg0: i32) -> (i32, i32, i32) {
    %c0_i32 = arith.constant 0 : i32
    %c0_i32_0 = arith.constant 0 : i32
    %c0_i32_1 = arith.constant 0 : i32
    return %arg0, %c0_i32, %c0_i32_0 : i32, i32, i32
  }
  func.func @transform_13(%arg0: i32) -> (i32, i32, i32) {
    %c0_i32 = arith.constant 0 : i32
    %c0_i32_0 = arith.constant 0 : i32
    %c0_i32_1 = arith.constant 0 : i32
    return %arg0, %c0_i32, %c0_i32_0 : i32, i32, i32
  }
  func.func @transform_14(%arg0: i32) -> (i32, i32, i32) {
    %c0_i32 = arith.constant 0 : i32
    %c0_i32_0 = arith.constant 0 : i32
    %c0_i32_1 = arith.constant 0 : i32
    return %arg0, %c0_i32, %c0_i32_0 : i32, i32, i32
  }
  func.func @transform_15(%arg0: i32) -> (i32, i32, i32) {
    %c0_i32 = arith.constant 0 : i32
    %c0_i32_0 = arith.constant 0 : i32
    %c0_i32_1 = arith.constant 0 : i32
    return %arg0, %c0_i32, %c0_i32_0 : i32, i32, i32
  }
  func.func @transform_16(%arg0: i32) -> (i32, i32, i32) {
    %c0_i32 = arith.constant 0 : i32
    %c0_i32_0 = arith.constant 0 : i32
    %c0_i32_1 = arith.constant 0 : i32
    return %arg0, %c0_i32, %c0_i32_0 : i32, i32, i32
  }
  func.func @transform_17(%arg0: i32) -> (i32, i32, i32) {
    %c0_i32 = arith.constant 0 : i32
    %c0_i32_0 = arith.constant 0 : i32
    %c0_i32_1 = arith.constant 0 : i32
    return %arg0, %c0_i32, %c0_i32_0 : i32, i32, i32
  }
  func.func @transform_18(%arg0: i32) -> (i32, i32, i32) {
    %c0_i32 = arith.constant 0 : i32
    %c0_i32_0 = arith.constant 0 : i32
    %c0_i32_1 = arith.constant 0 : i32
    return %arg0, %c0_i32, %c0_i32_0 : i32, i32, i32
  }
  func.func @transform_19(%arg0: i32) -> (i32, i32, i32) {
    %c0_i32 = arith.constant 0 : i32
    %c0_i32_0 = arith.constant 0 : i32
    %c0_i32_1 = arith.constant 0 : i32
    return %arg0, %c0_i32, %c0_i32_0 : i32, i32, i32
  }
  func.func @transform_20(%arg0: i32) -> (i32, i32) {
    %c0_i32 = arith.constant 0 : i32
    %c0_i32_0 = arith.constant 0 : i32
    %c0_i32_1 = arith.constant 0 : i32
    return %c0_i32, %c0_i32_0 : i32, i32
  }
}

</mosaic_0001>

<llo_original>
// kernel: tpu_custom_call.1
$region0: #{tpu_custom_call.1}
  #allocation0 [shape = 'u32[]', space=smem, size = 0x4, offset = 0x4, fixed_abs, tag = 'smem constant byte address 0x4 - core index']
  #allocation1 [shape = 'u32[144,128]{1,0:T(1,128)}', space=vmem, size = 0x12000, scoped, tag = 'internal scratch']
  #allocation2 [shape = 'f32[8,128]{1,0:T(8,128)}', space=vmem, size = 0x1000, scoped, tag = 'scratch operand']
  #allocation3 [shape = 'f32[8,1]{1,0:T(8,128)}', space=vmem, size = 0x1000, scoped, tag = 'scratch operand']
  #allocation4 [shape = 'bf16[8,16]{1,0:T(8,128)(2,1)}', space=vmem, size = 0x800, scoped, tag = 'scratch operand']
  #allocation5 [shape = 'bf16[16,16]{1,0:T(16,128)(2,1)}', space=vmem, size = 0x1000, scoped, tag = 'scratch operand']
  #allocation6 [shape = 'f32[16,128]{1,0:T(8,128)}', space=vmem, size = 0x2000, scoped, tag = 'scratch operand']
  %s0 = inlined_call_operand.hbm [shape: bf16[16,128], index: 0, kind: input, shape index: {}]
  %s1 = inlined_call_operand.hbm [shape: s32[1,16], index: 1, kind: input, shape index: {}]
  %s2 = inlined_call_operand.vmem [shape: s32[16,1], index: 2, kind: input, shape index: {}]
  %s3 = inlined_call_operand.vmem [shape: s32[16,1], index: 3, kind: input, shape index: {}]
  %s4 = inlined_call_operand.hbm [shape: bf16[128,128], index: 4, kind: input, shape index: {}]
  %s5 = inlined_call_operand.hbm [shape: f32[1,128], index: 5, kind: input, shape index: {}]
  %s6 = inlined_call_operand.hbm [shape: bf16[128,128], index: 6, kind: input, shape index: {}]
  %s7 = inlined_call_operand.hbm [shape: f32[1,128], index: 7, kind: input, shape index: {}]
  %s8 = inlined_call_operand.vmem [shape: bf16[128,128], index: 8, kind: input, shape index: {}]
  %s9 = inlined_call_operand.hbm [shape: f32[1,128], index: 9, kind: input, shape index: {}]
  %s10 = inlined_call_operand.hbm [shape: bf16[128,128], index: 10, kind: input, shape index: {}]
  %s11 = inlined_call_operand.vmem [shape: f32[1,128], index: 11, kind: input, shape index: {}]
  %s12 = inlined_call_operand.hbm [shape: bf16[2,128,128], index: 12, kind: input, shape index: {}]
  %s13 = inlined_call_operand.hbm [shape: bf16[2,128,128], index: 13, kind: input, shape index: {}]
  %s14 = inlined_call_operand.hbm [shape: bf16[2,128,128], index: 14, kind: input, shape index: {}]
  %s15 = inlined_call_operand.vmem [shape: f32[2,1,128], index: 15, kind: input, shape index: {}]
  %s16 = inlined_call_operand.hbm [shape: bf16[2,128,128], index: 16, kind: input, shape index: {}]
  %s17 = inlined_call_operand.vmem [shape: f32[2,1,128], index: 17, kind: input, shape index: {}]
  %s18 = inlined_call_operand.hbm [shape: bf16[2,128,128], index: 18, kind: input, shape index: {}]
  %s19 = inlined_call_operand.vmem [shape: f32[2,1,128], index: 19, kind: input, shape index: {}]
  %s20 = inlined_call_operand.hbm [shape: f32[8,128], index: 20, kind: output, shape index: {}]
  %s21 = sld [smem:[#allocation0]]
  $region173: #{tpu_custom_call.1} parent=0
    _
  %s23 = ssub.s32 1, %s21
  %s24 = scalar_select 0, %s23, %s21
  $region1: #{tpu_custom_call.1} parent=0
    #allocation7 [shape = 'u8[4096]{0}', space=vmem, size = 0x1000, scoped, tag = 'input window, operand 0, single buffered']
    #allocation8 [shape = 's32[2]{0}', space=sflag, size = 0x8, scoped, tag = 'scoped memory for tpu_custom_call.1']
    #allocation9 [shape = 's32[2]{0}', space=sflag, size = 0x8, scoped, tag = 'scoped memory for tpu_custom_call.1']
    #allocation10 [shape = 'u8[512]{0}', space=vmem, size = 0x400, scoped, tag = 'input window, operand 1, single buffered']
    #allocation11 [shape = 's32[1]{0}', space=sflag, size = 0x4, scoped, tag = 'scoped memory for tpu_custom_call.1']
    #allocation12 [shape = 'u8[32768]{0}', space=vmem, size = 0x8000, scoped, tag = 'input window, operand 4, single buffered']
    #allocation13 [shape = 'u8[512]{0}', space=vmem, size = 0x400, scoped, tag = 'input window, operand 5, single buffered']
    #allocation14 [shape = 's32[1]{0}', space=sflag, size = 0x4, scoped, tag = 'scoped memory for tpu_custom_call.1']
    #allocation15 [shape = 'u8[32768]{0}', space=vmem, size = 0x8000, scoped, tag = 'input window, operand 6, single buffered']
    #allocation16 [shape = 'u8[512]{0}', space=vmem, size = 0x400, scoped, tag = 'input window, operand 7, single buffered']
    #allocation17 [shape = 's32[1]{0}', space=sflag, size = 0x4, scoped, tag = 'scoped memory for tpu_custom_call.1']
    #allocation18 [shape = 'u8[512]{0}', space=vmem, size = 0x400, scoped, tag = 'input window, operand 9, single buffered']
    #allocation19 [shape = 'u8[32768]{0}', space=vmem, size = 0x8000, scoped, tag = 'input window, operand 10, single buffered']
    #allocation20 [shape = 's32[1]{0}', space=sflag, size = 0x4, scoped, tag = 'scoped memory for tpu_custom_call.1']
    #allocation21 [shape = 'u8[65536]{0}', space=vmem, size = 0x10000, scoped, tag = 'input window, operand 12']
    #allocation22 [shape = 'u8[65536]{0}', space=vmem, size = 0x10000, scoped, tag = 'input window, operand 13']
    #allocation23 [shape = 'u8[65536]{0}', space=vmem, size = 0x10000, scoped, tag = 'input window, operand 14']
    #allocation24 [shape = 'u8[65536]{0}', space=vmem, size = 0x10000, scoped, tag = 'input window, operand 16']
    #allocation25 [shape = 'u8[65536]{0}', space=vmem, size = 0x10000, scoped, tag = 'input window, operand 18']
    #allocation26 [shape = 'u8[4096]{0}', space=vmem, size = 0x1000, scoped, tag = 'output window, operand 0, single buffered']
    %25 = vsyncpa [#allocation8], 0
    %26 = vsyncpa [#allocation11], 0
    %27 = vsyncpa [#allocation14], 0
    %28 = vsyncpa [#allocation17], 0
    %29 = vsyncpa [#allocation20], 0
    %30 = vsyncpa [#allocation9], 0
    loop: start=0, step=1, limit=4
    $region2: #{tpu_custom_call.1} parent=1 // loop_pre_header
      _
    $region3: #{tpu_custom_call.1} parent=1 // loop_header
      %s32 = sphi 0, %s36
      %p33 = scmp.ge.s32.totalorder %s32, 4
      %s40 = sphi 0, %s40
      %s42 = sphi 0, %s40
      %s43 = sphi 0, %s42
      %s57 = sphi 0, %s43
      %s61 = sphi 0, %s61
      %s63 = sphi 0, %s61
      %s64 = sphi 0, %s63
      %s78 = sphi 0, %s64
      %s82 = sphi 0, %s82
      %s84 = sphi 0, %s82
      %s85 = sphi 0, %s84
      %s99 = sphi 0, %s85
      %s103 = sphi 0, %s103
      %s105 = sphi 0, %s103
      %s106 = sphi 0, %s105
      %s120 = sphi 0, %s106
      %s124 = sphi 0, %s124
      %s126 = sphi 0, %s124
      %s127 = sphi 0, %s126
      %s141 = sphi 0, %s127
      %s145 = sphi 0, %s145
      %s147 = sphi 0, %s145
      %s148 = sphi 0, %s147
      %s162 = sphi 0, %s148
      %s166 = sphi 0, %s166
      %s168 = sphi 0, %s166
      %s169 = sphi 0, %s168
      %s183 = sphi 0, %s169
      %s187 = sphi 0, %s187
      %s189 = sphi 0, %s187
      %s190 = sphi 0, %s189
      %s204 = sphi 0, %s190
      %s208 = sphi 0, %s208
      %s210 = sphi 0, %s208
      %s211 = sphi 0, %s210
      %s225 = sphi 0, %s211
      %s229 = sphi 0, %s229
      %s231 = sphi 0, %s229
      %s232 = sphi 0, %s231
      %s246 = sphi 0, %s232
      %s250 = sphi 0, %s250
      %s252 = sphi 0, %s250
      %s253 = sphi 0, %s252
      %s267 = sphi 0, %s253
      %s271 = sphi 0, %s271
      %s273 = sphi 0, %s271
      %s274 = sphi 0, %s273
      %s288 = sphi 0, %s274
      %s294 = sphi 0, %s296
      %s297 = sphi 0, %s294
      %s298 = sphi 0, %s297
      %s314 = sphi 0, %s298
      %s320 = sphi 0, %s322
      %s323 = sphi 0, %s320
      %s324 = sphi 0, %s323
      %s340 = sphi 0, %s324
      %s346 = sphi 0, %s348
      %s349 = sphi 0, %s346
      %s350 = sphi 0, %s349
      %s366 = sphi 0, %s350
      %s372 = sphi 0, %s374
      %s375 = sphi 0, %s372
      %s376 = sphi 0, %s375
      %s392 = sphi 0, %s376
      %s398 = sphi 0, %s400
      %s401 = sphi 0, %s398
      %s402 = sphi 0, %s401
      %s418 = sphi 0, %s402
      %s424 = sphi 0, %s426
      %s427 = sphi 0, %s424
      %s428 = sphi 0, %s427
      %s444 = sphi 0, %s428
      %s450 = sphi 0, %s452
      %s453 = sphi 0, %s450
      %s454 = sphi 0, %s453
      %s470 = sphi 0, %s454
      %s476 = sphi 0, %s478
      %s479 = sphi 0, %s476
      %s480 = sphi 0, %s479
      %s496 = sphi 0, %s480
      %s500 = sphi 0, %s500
      %s502 = sphi 0, %s500
      %s503 = sphi 0, %s502
      %s517 = sphi 0, %s503
    $region4: #{tpu_custom_call.1} parent=1 // loop_header_branch
      %35 = sbr.rel (%p33) target = $region8
    $region5: #{tpu_custom_call.1} parent=1 // loop_body
      %s37 = ssub.s32 %s32, 1
      %s38 = ssub.s32 %s32, 2
      %s39 = sadd.s32 %s32, 1
      %s41 = sadd.s32 %s40, 1
      %p44 = scmp.eq.s32.totalorder %s32, 1
      %p45 = scmp.ne.s32.totalorder %s40, %s42
      %p46 = scmp.eq.s32.totalorder %s32, 0
      %p47 = por %p45, %p46
      %p48 = scmp.ne.s32.totalorder %s40, %s42
      %p49 = scmp.eq.s32.totalorder %s37, 1
      %p50 = por %p48, %p49
      %p51 = scmp.ne.s32.totalorder %s42, %s43
      %p52 = scmp.eq.s32.totalorder %s37, 0
      %p53 = por %p51, %p52
      %p54 = scmp.ne.s32.totalorder %s42, %s43
      %p55 = scmp.eq.s32.totalorder %s38, 1
      %p56 = por %p54, %p55
      %p58 = scmp.ne.s32.totalorder %s43, %s57
      %p59 = scmp.eq.s32.totalorder %s38, 0
      %p60 = por %p58, %p59
      %s62 = sadd.s32 %s61, 1
      %p65 = scmp.eq.s32.totalorder %s32, 1
      %p66 = scmp.ne.s32.totalorder %s61, %s63
      %p67 = scmp.eq.s32.totalorder %s32, 0
      %p68 = por %p66, %p67
      %p69 = scmp.ne.s32.totalorder %s61, %s63
      %p70 = scmp.eq.s32.totalorder %s37, 1
      %p71 = por %p69, %p70
      %p72 = scmp.ne.s32.totalorder %s63, %s64
      %p73 = scmp.eq.s32.totalorder %s37, 0
      %p74 = por %p72, %p73
      %p75 = scmp.ne.s32.totalorder %s63, %s64
      %p76 = scmp.eq.s32.totalorder %s38, 1
      %p77 = por %p75, %p76
      %p79 = scmp.ne.s32.totalorder %s64, %s78
      %p80 = scmp.eq.s32.totalorder %s38, 0
      %p81 = por %p79, %p80
      %s83 = sadd.s32 %s82, 1
      %p86 = scmp.eq.s32.totalorder %s32, 1
      %p87 = scmp.ne.s32.totalorder %s82, %s84
      %p88 = scmp.eq.s32.totalorder %s32, 0
      %p89 = por %p87, %p88
      %p90 = scmp.ne.s32.totalorder %s82, %s84
      %p91 = scmp.eq.s32.totalorder %s37, 1
      %p92 = por %p90, %p91
      %p93 = scmp.ne.s32.totalorder %s84, %s85
      %p94 = scmp.eq.s32.totalorder %s37, 0
      %p95 = por %p93, %p94
      %p96 = scmp.ne.s32.totalorder %s84, %s85
      %p97 = scmp.eq.s32.totalorder %s38, 1
      %p98 = por %p96, %p97
      %p100 = scmp.ne.s32.totalorder %s85, %s99
      %p101 = scmp.eq.s32.totalorder %s38, 0
      %p102 = por %p100, %p101
      %s104 = sadd.s32 %s103, 1
      %p107 = scmp.eq.s32.totalorder %s32, 1
      %p108 = scmp.ne.s32.totalorder %s103, %s105
      %p109 = scmp.eq.s32.totalorder %s32, 0
      %p110 = por %p108, %p109
      %p111 = scmp.ne.s32.totalorder %s103, %s105
      %p112 = scmp.eq.s32.totalorder %s37, 1
      %p113 = por %p111, %p112
      %p114 = scmp.ne.s32.totalorder %s105, %s106
      %p115 = scmp.eq.s32.totalorder %s37, 0
      %p116 = por %p114, %p115
      %p117 = scmp.ne.s32.totalorder %s105, %s106
      %p118 = scmp.eq.s32.totalorder %s38, 1
      %p119 = por %p117, %p118
      %p121 = scmp.ne.s32.totalorder %s106, %s120
      %p122 = scmp.eq.s32.totalorder %s38, 0
      %p123 = por %p121, %p122
      %s125 = sadd.s32 %s124, 1
      %p128 = scmp.eq.s32.totalorder %s32, 1
      %p129 = scmp.ne.s32.totalorder %s124, %s126
      %p130 = scmp.eq.s32.totalorder %s32, 0
      %p131 = por %p129, %p130
      %p132 = scmp.ne.s32.totalorder %s124, %s126
      %p133 = scmp.eq.s32.totalorder %s37, 1
      %p134 = por %p132, %p133
      %p135 = scmp.ne.s32.totalorder %s126, %s127
      %p136 = scmp.eq.s32.totalorder %s37, 0
      %p137 = por %p135, %p136
      %p138 = scmp.ne.s32.totalorder %s126, %s127
      %p139 = scmp.eq.s32.totalorder %s38, 1
      %p140 = por %p138, %p139
      %p142 = scmp.ne.s32.totalorder %s127, %s141
      %p143 = scmp.eq.s32.totalorder %s38, 0
      %p144 = por %p142, %p143
      %s146 = sadd.s32 %s145, 1
      %p149 = scmp.eq.s32.totalorder %s32, 1
      %p150 = scmp.ne.s32.totalorder %s145, %s147
      %p151 = scmp.eq.s32.totalorder %s32, 0
      %p152 = por %p150, %p151
      %p153 = scmp.ne.s32.totalorder %s145, %s147
      %p154 = scmp.eq.s32.totalorder %s37, 1
      %p155 = por %p153, %p154
      %p156 = scmp.ne.s32.totalorder %s147, %s148
      %p157 = scmp.eq.s32.totalorder %s37, 0
      %p158 = por %p156, %p157
      %p159 = scmp.ne.s32.totalorder %s147, %s148
      %p160 = scmp.eq.s32.totalorder %s38, 1
      %p161 = por %p159, %p160
      %p163 = scmp.ne.s32.totalorder %s148, %s162
      %p164 = scmp.eq.s32.totalorder %s38, 0
      %p165 = por %p163, %p164
      %s167 = sadd.s32 %s166, 1
      %p170 = scmp.eq.s32.totalorder %s32, 1
      %p171 = scmp.ne.s32.totalorder %s166, %s168
      %p172 = scmp.eq.s32.totalorder %s32, 0
      %p173 = por %p171, %p172
      %p174 = scmp.ne.s32.totalorder %s166, %s168
      %p175 = scmp.eq.s32.totalorder %s37, 1
      %p176 = por %p174, %p175
      %p177 = scmp.ne.s32.totalorder %s168, %s169
      %p178 = scmp.eq.s32.totalorder %s37, 0
      %p179 = por %p177, %p178
      %p180 = scmp.ne.s32.totalorder %s168, %s169
      %p181 = scmp.eq.s32.totalorder %s38, 1
      %p182 = por %p180, %p181
      %p184 = scmp.ne.s32.totalorder %s169, %s183
      %p185 = scmp.eq.s32.totalorder %s38, 0
      %p186 = por %p184, %p185
      %s188 = sadd.s32 %s187, 1
      %p191 = scmp.eq.s32.totalorder %s32, 1
      %p192 = scmp.ne.s32.totalorder %s187, %s189
      %p193 = scmp.eq.s32.totalorder %s32, 0
      %p194 = por %p192, %p193
      %p195 = scmp.ne.s32.totalorder %s187, %s189
      %p196 = scmp.eq.s32.totalorder %s37, 1
      %p197 = por %p195, %p196
      %p198 = scmp.ne.s32.totalorder %s189, %s190
      %p199 = scmp.eq.s32.totalorder %s37, 0
      %p200 = por %p198, %p199
      %p201 = scmp.ne.s32.totalorder %s189, %s190
      %p202 = scmp.eq.s32.totalorder %s38, 1
      %p203 = por %p201, %p202
      %p205 = scmp.ne.s32.totalorder %s190, %s204
      %p206 = scmp.eq.s32.totalorder %s38, 0
      %p207 = por %p205, %p206
      %s209 = sadd.s32 %s208, 1
      %p212 = scmp.eq.s32.totalorder %s32, 1
      %p213 = scmp.ne.s32.totalorder %s208, %s210
      %p214 = scmp.eq.s32.totalorder %s32, 0
      %p215 = por %p213, %p214
      %p216 = scmp.ne.s32.totalorder %s208, %s210
      %p217 = scmp.eq.s32.totalorder %s37, 1
      %p218 = por %p216, %p217
      %p219 = scmp.ne.s32.totalorder %s210, %s211
      %p220 = scmp.eq.s32.totalorder %s37, 0
      %p221 = por %p219, %p220
      %p222 = scmp.ne.s32.totalorder %s210, %s211
      %p223 = scmp.eq.s32.totalorder %s38, 1
      %p224 = por %p222, %p223
      %p226 = scmp.ne.s32.totalorder %s211, %s225
      %p227 = scmp.eq.s32.totalorder %s38, 0
      %p228 = por %p226, %p227
      %s230 = sadd.s32 %s229, 1
      %p233 = scmp.eq.s32.totalorder %s32, 1
      %p234 = scmp.ne.s32.totalorder %s229, %s231
      %p235 = scmp.eq.s32.totalorder %s32, 0
      %p236 = por %p234, %p235
      %p237 = scmp.ne.s32.totalorder %s229, %s231
      %p238 = scmp.eq.s32.totalorder %s37, 1
      %p239 = por %p237, %p238
      %p240 = scmp.ne.s32.totalorder %s231, %s232
      %p241 = scmp.eq.s32.totalorder %s37, 0
      %p242 = por %p240, %p241
      %p243 = scmp.ne.s32.totalorder %s231, %s232
      %p244 = scmp.eq.s32.totalorder %s38, 1
      %p245 = por %p243, %p244
      %p247 = scmp.ne.s32.totalorder %s232, %s246
      %p248 = scmp.eq.s32.totalorder %s38, 0
      %p249 = por %p247, %p248
      %s251 = sadd.s32 %s250, 1
      %p254 = scmp.eq.s32.totalorder %s32, 1
      %p255 = scmp.ne.s32.totalorder %s250, %s252
      %p256 = scmp.eq.s32.totalorder %s32, 0
      %p257 = por %p255, %p256
      %p258 = scmp.ne.s32.totalorder %s250, %s252
      %p259 = scmp.eq.s32.totalorder %s37, 1
      %p260 = por %p258, %p259
      %p261 = scmp.ne.s32.totalorder %s252, %s253
      %p262 = scmp.eq.s32.totalorder %s37, 0
      %p263 = por %p261, %p262
      %p264 = scmp.ne.s32.totalorder %s252, %s253
      %p265 = scmp.eq.s32.totalorder %s38, 1
      %p266 = por %p264, %p265
      %p268 = scmp.ne.s32.totalorder %s253, %s267
      %p269 = scmp.eq.s32.totalorder %s38, 0
      %p270 = por %p268, %p269
      %s272 = sadd.s32 %s271, 1
      %p275 = scmp.eq.s32.totalorder %s32, 1
      %p276 = scmp.ne.s32.totalorder %s271, %s273
      %p277 = scmp.eq.s32.totalorder %s32, 0
      %p278 = por %p276, %p277
      %p279 = scmp.ne.s32.totalorder %s271, %s273
      %p280 = scmp.eq.s32.totalorder %s37, 1
      %p281 = por %p279, %p280
      %p282 = scmp.ne.s32.totalorder %s273, %s274
      %p283 = scmp.eq.s32.totalorder %s37, 0
      %p284 = por %p282, %p283
      %p285 = scmp.ne.s32.totalorder %s273, %s274
      %p286 = scmp.eq.s32.totalorder %s38, 1
      %p287 = por %p285, %p286
      %p289 = scmp.ne.s32.totalorder %s274, %s288
      %p290 = scmp.eq.s32.totalorder %s38, 0
      %p291 = por %p289, %p290
      %s292 = ssub.s32 %s32, %s39
      %p293 = scmp.eq.s32.totalorder %s292, 0
      %s295 = sadd.s32 %s294, 1
      %s296 = scalar_select %p293, %s294, %s295
      %p299 = pneg %p293
      %p300 = scmp.eq.s32.totalorder %s32, 1
      %p301 = por %p299, %p300
      %p302 = scmp.ne.s32.totalorder %s294, %s297
      %p303 = scmp.eq.s32.totalorder %s32, 0
      %p304 = por %p302, %p303
      %p305 = scmp.ne.s32.totalorder %s294, %s297
      %p306 = scmp.eq.s32.totalorder %s37, 1
      %p307 = por %p305, %p306
      %p308 = scmp.ne.s32.totalorder %s297, %s298
      %p309 = scmp.eq.s32.totalorder %s37, 0
      %p310 = por %p308, %p309
      %p311 = scmp.ne.s32.totalorder %s297, %s298
      %p312 = scmp.eq.s32.totalorder %s38, 1
      %p313 = por %p311, %p312
      %p315 = scmp.ne.s32.totalorder %s298, %s314
      %p316 = scmp.eq.s32.totalorder %s38, 0
      %p317 = por %p315, %p316
      %s318 = ssub.s32 %s32, %s39
      %p319 = scmp.eq.s32.totalorder %s318, 0
      %s321 = sadd.s32 %s320, 1
      %s322 = scalar_select %p319, %s320, %s321
      %p325 = pneg %p319
      %p326 = scmp.eq.s32.totalorder %s32, 1
      %p327 = por %p325, %p326
      %p328 = scmp.ne.s32.totalorder %s320, %s323
      %p329 = scmp.eq.s32.totalorder %s32, 0
      %p330 = por %p328, %p329
      %p331 = scmp.ne.s32.totalorder %s320, %s323
      %p332 = scmp.eq.s32.totalorder %s37, 1
      %p333 = por %p331, %p332
      %p334 = scmp.ne.s32.totalorder %s323, %s324
      %p335 = scmp.eq.s32.totalorder %s37, 0
      %p336 = por %p334, %p335
      %p337 = scmp.ne.s32.totalorder %s323, %s324
      %p338 = scmp.eq.s32.totalorder %s38, 1
      %p339 = por %p337, %p338
      %p341 = scmp.ne.s32.totalorder %s324, %s340
      %p342 = scmp.eq.s32.totalorder %s38, 0
      %p343 = por %p341, %p342
      %s344 = ssub.s32 %s32, %s39
      %p345 = scmp.eq.s32.totalorder %s344, 0
      %s347 = sadd.s32 %s346, 1
      %s348 = scalar_select %p345, %s346, %s347
      %p351 = pneg %p345
      %p352 = scmp.eq.s32.totalorder %s32, 1
      %p353 = por %p351, %p352
      %p354 = scmp.ne.s32.totalorder %s346, %s349
      %p355 = scmp.eq.s32.totalorder %s32, 0
      %p356 = por %p354, %p355
      %p357 = scmp.ne.s32.totalorder %s346, %s349
      %p358 = scmp.eq.s32.totalorder %s37, 1
      %p359 = por %p357, %p358
      %p360 = scmp.ne.s32.totalorder %s349, %s350
      %p361 = scmp.eq.s32.totalorder %s37, 0
      %p362 = por %p360, %p361
      %p363 = scmp.ne.s32.totalorder %s349, %s350
      %p364 = scmp.eq.s32.totalorder %s38, 1
      %p365 = por %p363, %p364
      %p367 = scmp.ne.s32.totalorder %s350, %s366
      %p368 = scmp.eq.s32.totalorder %s38, 0
      %p369 = por %p367, %p368
      %s370 = ssub.s32 %s32, %s39
      %p371 = scmp.eq.s32.totalorder %s370, 0
      %s373 = sadd.s32 %s372, 1
      %s374 = scalar_select %p371, %s372, %s373
      %p377 = pneg %p371
      %p378 = scmp.eq.s32.totalorder %s32, 1
      %p379 = por %p377, %p378
      %p380 = scmp.ne.s32.totalorder %s372, %s375
      %p381 = scmp.eq.s32.totalorder %s32, 0
      %p382 = por %p380, %p381
      %p383 = scmp.ne.s32.totalorder %s372, %s375
      %p384 = scmp.eq.s32.totalorder %s37, 1
      %p385 = por %p383, %p384
      %p386 = scmp.ne.s32.totalorder %s375, %s376
      %p387 = scmp.eq.s32.totalorder %s37, 0
      %p388 = por %p386, %p387
      %p389 = scmp.ne.s32.totalorder %s375, %s376
      %p390 = scmp.eq.s32.totalorder %s38, 1
      %p391 = por %p389, %p390
      %p393 = scmp.ne.s32.totalorder %s376, %s392
      %p394 = scmp.eq.s32.totalorder %s38, 0
      %p395 = por %p393, %p394
      %s396 = ssub.s32 %s32, %s39
      %p397 = scmp.eq.s32.totalorder %s396, 0
      %s399 = sadd.s32 %s398, 1
      %s400 = scalar_select %p397, %s398, %s399
      %p403 = pneg %p397
      %p404 = scmp.eq.s32.totalorder %s32, 1
      %p405 = por %p403, %p404
      %p406 = scmp.ne.s32.totalorder %s398, %s401
      %p407 = scmp.eq.s32.totalorder %s32, 0
      %p408 = por %p406, %p407
      %p409 = scmp.ne.s32.totalorder %s398, %s401
      %p410 = scmp.eq.s32.totalorder %s37, 1
      %p411 = por %p409, %p410
      %p412 = scmp.ne.s32.totalorder %s401, %s402
      %p413 = scmp.eq.s32.totalorder %s37, 0
      %p414 = por %p412, %p413
      %p415 = scmp.ne.s32.totalorder %s401, %s402
      %p416 = scmp.eq.s32.totalorder %s38, 1
      %p417 = por %p415, %p416
      %p419 = scmp.ne.s32.totalorder %s402, %s418
      %p420 = scmp.eq.s32.totalorder %s38, 0
      %p421 = por %p419, %p420
      %s422 = ssub.s32 %s32, %s39
      %p423 = scmp.eq.s32.totalorder %s422, 0
      %s425 = sadd.s32 %s424, 1
      %s426 = scalar_select %p423, %s424, %s425
      %p429 = pneg %p423
      %p430 = scmp.eq.s32.totalorder %s32, 1
      %p431 = por %p429, %p430
      %p432 = scmp.ne.s32.totalorder %s424, %s427
      %p433 = scmp.eq.s32.totalorder %s32, 0
      %p434 = por %p432, %p433
      %p435 = scmp.ne.s32.totalorder %s424, %s427
      %p436 = scmp.eq.s32.totalorder %s37, 1
      %p437 = por %p435, %p436
      %p438 = scmp.ne.s32.totalorder %s427, %s428
      %p439 = scmp.eq.s32.totalorder %s37, 0
      %p440 = por %p438, %p439
      %p441 = scmp.ne.s32.totalorder %s427, %s428
      %p442 = scmp.eq.s32.totalorder %s38, 1
      %p443 = por %p441, %p442
      %p445 = scmp.ne.s32.totalorder %s428, %s444
      %p446 = scmp.eq.s32.totalorder %s38, 0
      %p447 = por %p445, %p446
      %s448 = ssub.s32 %s32, %s39
      %p449 = scmp.eq.s32.totalorder %s448, 0
      %s451 = sadd.s32 %s450, 1
      %s452 = scalar_select %p449, %s450, %s451
      %p455 = pneg %p449
      %p456 = scmp.eq.s32.totalorder %s32, 1
      %p457 = por %p455, %p456
      %p458 = scmp.ne.s32.totalorder %s450, %s453
      %p459 = scmp.eq.s32.totalorder %s32, 0
      %p460 = por %p458, %p459
      %p461 = scmp.ne.s32.totalorder %s450, %s453
      %p462 = scmp.eq.s32.totalorder %s37, 1
      %p463 = por %p461, %p462
      %p464 = scmp.ne.s32.totalorder %s453, %s454
      %p465 = scmp.eq.s32.totalorder %s37, 0
      %p466 = por %p464, %p465
      %p467 = scmp.ne.s32.totalorder %s453, %s454
      %p468 = scmp.eq.s32.totalorder %s38, 1
      %p469 = por %p467, %p468
      %p471 = scmp.ne.s32.totalorder %s454, %s470
      %p472 = scmp.eq.s32.totalorder %s38, 0
      %p473 = por %p471, %p472
      %s474 = ssub.s32 %s32, %s39
      %p475 = scmp.eq.s32.totalorder %s474, 0
      %s477 = sadd.s32 %s476, 1
      %s478 = scalar_select %p475, %s476, %s477
      %p481 = pneg %p475
      %p482 = scmp.eq.s32.totalorder %s32, 1
      %p483 = por %p481, %p482
      %p484 = scmp.ne.s32.totalorder %s476, %s479
      %p485 = scmp.eq.s32.totalorder %s32, 0
      %p486 = por %p484, %p485
      %p487 = scmp.ne.s32.totalorder %s476, %s479
      %p488 = scmp.eq.s32.totalorder %s37, 1
      %p489 = por %p487, %p488
      %p490 = scmp.ne.s32.totalorder %s479, %s480
      %p491 = scmp.eq.s32.totalorder %s37, 0
      %p492 = por %p490, %p491
      %p493 = scmp.ne.s32.totalorder %s479, %s480
      %p494 = scmp.eq.s32.totalorder %s38, 1
      %p495 = por %p493, %p494
      %p497 = scmp.ne.s32.totalorder %s480, %s496
      %p498 = scmp.eq.s32.totalorder %s38, 0
      %p499 = por %p497, %p498
      %s501 = sadd.s32 %s500, 1
      %p504 = scmp.eq.s32.totalorder %s32, 1
      %p505 = scmp.ne.s32.totalorder %s500, %s502
      %p506 = scmp.eq.s32.totalorder %s32, 0
      %p507 = por %p505, %p506
      %p508 = scmp.ne.s32.totalorder %s500, %s502
      %p509 = scmp.eq.s32.totalorder %s37, 1
      %p510 = por %p508, %p509
      %p511 = scmp.ne.s32.totalorder %s502, %s503
      %p512 = scmp.eq.s32.totalorder %s37, 0
      %p513 = por %p511, %p512
      %p514 = scmp.ne.s32.totalorder %s502, %s503
      %p515 = scmp.eq.s32.totalorder %s38, 1
      %p516 = por %p514, %p515
      %p518 = scmp.ne.s32.totalorder %s503, %s517
      %p519 = scmp.eq.s32.totalorder %s38, 0
      %p520 = por %p518, %p519
      %p521 = scmp.le.s32.totalorder 1, %s32
      %p522 = scmp.lt.s32.totalorder %s32, 3
      %p523 = pnand %p521, %p522
      %p524 = pneg %p523
      // Predicated region
      $region9: #{tpu_custom_call.1} parent=5 // pred_check
        _
      $region10: #{tpu_custom_call.1} parent=5 // pred_check_branch
        %526 = sbr.rel (%p523) target = $region12
      $region11: #{tpu_custom_call.1} parent=5 // pred_region
        %s527 = ssub.s32 %s32, 1
        // Predicated region
        $region13: #{tpu_custom_call.1} parent=11 // pred_check
          %p528 = pneg %p53
        $region14: #{tpu_custom_call.1} parent=11 // pred_check_branch
          %530 = sbr.rel (%p528) target = $region16
        $region15: #{tpu_custom_call.1} parent=11 // pred_region
          %s532 = ssub.s32 128, 128
          %533 = vsyncadd [#allocation8], %s532
          %s534 = sshll.u32 [#allocation7], 4
          %s535 = int_to_ptr.vmem [resolvable:$true] %s534
          %540 = dma.hbm_to_vmem [thread:$0]  %s0, 128, %s535, [#allocation8], 64, 64, 4
        $region16: #{tpu_custom_call.1} parent=11 // pred_fallthru
          _
        // Predicated region
        $region17: #{tpu_custom_call.1} parent=11 // pred_check
          %p541 = pneg %p74
        $region18: #{tpu_custom_call.1} parent=11 // pred_check_branch
          %543 = sbr.rel (%p541) target = $region20
        $region19: #{tpu_custom_call.1} parent=11 // pred_region
          %s545 = ssub.s32 16, 16
          %546 = vsyncadd [#allocation11], %s545
          %s548 = sshll.u32 [#allocation10], 4
          %s549 = int_to_ptr.vmem [resolvable:$true] %s548
          %551 = dma.hbm_to_vmem [thread:$0]  %s1, 16, %s549, [#allocation11]
        $region20: #{tpu_custom_call.1} parent=11 // pred_fallthru
          _
        // Predicated region
        $region21: #{tpu_custom_call.1} parent=11 // pred_check
          %p552 = pneg %p95
        $region22: #{tpu_custom_call.1} parent=11 // pred_check_branch
          %554 = sbr.rel (%p552) target = $region24
        $region23: #{tpu_custom_call.1} parent=11 // pred_region
          _
        $region24: #{tpu_custom_call.1} parent=11 // pred_fallthru
          _
        // Predicated region
        $region25: #{tpu_custom_call.1} parent=11 // pred_check
          %p555 = pneg %p116
        $region26: #{tpu_custom_call.1} parent=11 // pred_check_branch
          %557 = sbr.rel (%p555) target = $region28
        $region27: #{tpu_custom_call.1} parent=11 // pred_region
          _
        $region28: #{tpu_custom_call.1} parent=11 // pred_fallthru
          _
        // Predicated region
        $region29: #{tpu_custom_call.1} parent=11 // pred_check
          %p558 = pneg %p137
        $region30: #{tpu_custom_call.1} parent=11 // pred_check_branch
          %560 = sbr.rel (%p558) target = $region32
        $region31: #{tpu_custom_call.1} parent=11 // pred_region
          %s562 = ssub.s32 1024, 1024
          %563 = vsyncadd [#allocation11], %s562
          %s564 = sshll.u32 [#allocation12], 4
          %s565 = int_to_ptr.vmem [resolvable:$true] %s564
          %570 = dma.hbm_to_vmem [thread:$0]  %s4, 1024, %s565, [#allocation11], 64, 64, 4
        $region32: #{tpu_custom_call.1} parent=11 // pred_fallthru
          _
        // Predicated region
        $region33: #{tpu_custom_call.1} parent=11 // pred_check
          %p571 = pneg %p158
        $region34: #{tpu_custom_call.1} parent=11 // pred_check_branch
          %573 = sbr.rel (%p571) target = $region36
        $region35: #{tpu_custom_call.1} parent=11 // pred_region
          %s575 = ssub.s32 16, 16
          %576 = vsyncadd [#allocation14], %s575
          %s578 = sshll.u32 [#allocation13], 4
          %s579 = int_to_ptr.vmem [resolvable:$true] %s578
          %581 = dma.hbm_to_vmem [thread:$0]  %s5, 16, %s579, [#allocation14]
        $region36: #{tpu_custom_call.1} parent=11 // pred_fallthru
          _
        // Predicated region
        $region37: #{tpu_custom_call.1} parent=11 // pred_check
          %p582 = pneg %p179
        $region38: #{tpu_custom_call.1} parent=11 // pred_check_branch
          %584 = sbr.rel (%p582) target = $region40
        $region39: #{tpu_custom_call.1} parent=11 // pred_region
          %s586 = ssub.s32 1024, 1024
          %587 = vsyncadd [#allocation14], %s586
          %s588 = sshll.u32 [#allocation15], 4
          %s589 = int_to_ptr.vmem [resolvable:$true] %s588
          %594 = dma.hbm_to_vmem [thread:$0]  %s6, 1024, %s589, [#allocation14], 64, 64, 4
        $region40: #{tpu_custom_call.1} parent=11 // pred_fallthru
          _
        // Predicated region
        $region41: #{tpu_custom_call.1} parent=11 // pred_check
          %p595 = pneg %p200
        $region42: #{tpu_custom_call.1} parent=11 // pred_check_branch
          %597 = sbr.rel (%p595) target = $region44
        $region43: #{tpu_custom_call.1} parent=11 // pred_region
          %s599 = ssub.s32 16, 16
          %600 = vsyncadd [#allocation17], %s599
          %s602 = sshll.u32 [#allocation16], 4
          %s603 = int_to_ptr.vmem [resolvable:$true] %s602
          %605 = dma.hbm_to_vmem [thread:$0]  %s7, 16, %s603, [#allocation17]
        $region44: #{tpu_custom_call.1} parent=11 // pred_fallthru
          _
        // Predicated region
        $region45: #{tpu_custom_call.1} parent=11 // pred_check
          %p606 = pneg %p221
        $region46: #{tpu_custom_call.1} parent=11 // pred_check_branch
          %608 = sbr.rel (%p606) target = $region48
        $region47: #{tpu_custom_call.1} parent=11 // pred_region
          _
        $region48: #{tpu_custom_call.1} parent=11 // pred_fallthru
          _
        // Predicated region
        $region49: #{tpu_custom_call.1} parent=11 // pred_check
          %p609 = pneg %p242
        $region50: #{tpu_custom_call.1} parent=11 // pred_check_branch
          %611 = sbr.rel (%p609) target = $region52
        $region51: #{tpu_custom_call.1} parent=11 // pred_region
          %s613 = ssub.s32 16, 16
          %614 = vsyncadd [#allocation17], %s613
          %s616 = sshll.u32 [#allocation18], 4
          %s617 = int_to_ptr.vmem [resolvable:$true] %s616
          %619 = dma.hbm_to_vmem [thread:$0]  %s9, 16, %s617, [#allocation17]
        $region52: #{tpu_custom_call.1} parent=11 // pred_fallthru
          _
        // Predicated region
        $region53: #{tpu_custom_call.1} parent=11 // pred_check
          %p620 = pneg %p263
        $region54: #{tpu_custom_call.1} parent=11 // pred_check_branch
          %622 = sbr.rel (%p620) target = $region56
        $region55: #{tpu_custom_call.1} parent=11 // pred_region
          %s624 = ssub.s32 1024, 1024
          %625 = vsyncadd [#allocation20], %s624
          %s626 = sshll.u32 [#allocation19], 4
          %s627 = int_to_ptr.vmem [resolvable:$true] %s626
          %632 = dma.hbm_to_vmem [thread:$0]  %s10, 1024, %s627, [#allocation20], 64, 64, 4
        $region56: #{tpu_custom_call.1} parent=11 // pred_fallthru
          _
        // Predicated region
        $region57: #{tpu_custom_call.1} parent=11 // pred_check
          %p633 = pneg %p284
        $region58: #{tpu_custom_call.1} parent=11 // pred_check_branch
          %635 = sbr.rel (%p633) target = $region60
        $region59: #{tpu_custom_call.1} parent=11 // pred_region
          _
        $region60: #{tpu_custom_call.1} parent=11 // pred_fallthru
          _
      $region12: #{tpu_custom_call.1} parent=5 // pred_fallthru
        _
      %p636 = scmp.lt.s32.totalorder %s32, 2
      // Predicated region
      $region61: #{tpu_custom_call.1} parent=5 // pred_check
        %p637 = pneg %p636
      $region62: #{tpu_custom_call.1} parent=5 // pred_check_branch
        %639 = sbr.rel (%p637) target = $region64
      $region63: #{tpu_custom_call.1} parent=5 // pred_region
        // Predicated region
        $region65: #{tpu_custom_call.1} parent=63 // pred_check
          %p640 = pneg %p304
        $region66: #{tpu_custom_call.1} parent=63 // pred_check_branch
          %642 = sbr.rel (%p640) target = $region68
        $region67: #{tpu_custom_call.1} parent=63 // pred_region
          %s643 = sand.u32 %s32, 1
          %s644 = scalar_lea.sflag [#allocation8], %s643
          %s645 = sand.u32 %s294, 1
          %s646 = smul.addr %s645, 64
          %s647 = scalar_lea.vmem [#allocation21], %s646
          %s649 = ssub.s32 1024, 1024
          %650 = vsyncadd %s644, %s649
          %s651 = smul.addr %s32, 16
          %s652 = smul.addr %s651, 64
          %s653 = scalar_lea.hbm %s12, %s652
          %s654 = sshll.u32 %s647, 4
          %s655 = int_to_ptr.vmem [resolvable:$true] %s654
          %660 = dma.hbm_to_vmem [thread:$0]  %s653, 1024, %s655, %s644, 64, 64, 4
        $region68: #{tpu_custom_call.1} parent=63 // pred_fallthru
          _
        // Predicated region
        $region69: #{tpu_custom_call.1} parent=63 // pred_check
          %p661 = pneg %p330
        $region70: #{tpu_custom_call.1} parent=63 // pred_check_branch
          %663 = sbr.rel (%p661) target = $region72
        $region71: #{tpu_custom_call.1} parent=63 // pred_region
          %s664 = sand.u32 %s32, 1
          %s665 = scalar_lea.sflag [#allocation8], %s664
          %s666 = sand.u32 %s320, 1
          %s667 = smul.addr %s666, 64
          %s668 = scalar_lea.vmem [#allocation22], %s667
          %s670 = ssub.s32 1024, 1024
          %671 = vsyncadd %s665, %s670
          %s672 = smul.addr %s32, 16
          %s673 = smul.addr %s672, 64
          %s674 = scalar_lea.hbm %s13, %s673
          %s675 = sshll.u32 %s668, 4
          %s676 = int_to_ptr.vmem [resolvable:$true] %s675
          %681 = dma.hbm_to_vmem [thread:$0]  %s674, 1024, %s676, %s665, 64, 64, 4
        $region72: #{tpu_custom_call.1} parent=63 // pred_fallthru
          _
        // Predicated region
        $region73: #{tpu_custom_call.1} parent=63 // pred_check
          %p682 = pneg %p356
        $region74: #{tpu_custom_call.1} parent=63 // pred_check_branch
          %684 = sbr.rel (%p682) target = $region76
        $region75: #{tpu_custom_call.1} parent=63 // pred_region
          %s685 = sand.u32 %s32, 1
          %s686 = scalar_lea.sflag [#allocation8], %s685
          %s687 = sand.u32 %s346, 1
          %s688 = smul.addr %s687, 64
          %s689 = scalar_lea.vmem [#allocation23], %s688
          %s691 = ssub.s32 1024, 1024
          %692 = vsyncadd %s686, %s691
          %s693 = smul.addr %s32, 16
          %s694 = smul.addr %s693, 64
          %s695 = scalar_lea.hbm %s14, %s694
          %s696 = sshll.u32 %s689, 4
          %s697 = int_to_ptr.vmem [resolvable:$true] %s696
          %702 = dma.hbm_to_vmem [thread:$0]  %s695, 1024, %s697, %s686, 64, 64, 4
        $region76: #{tpu_custom_call.1} parent=63 // pred_fallthru
          _
        // Predicated region
        $region77: #{tpu_custom_call.1} parent=63 // pred_check
          %p703 = pneg %p382
        $region78: #{tpu_custom_call.1} parent=63 // pred_check_branch
          %705 = sbr.rel (%p703) target = $region80
        $region79: #{tpu_custom_call.1} parent=63 // pred_region
          %p706 = scmp.lt.s32.totalorder %s32, 1
          %s707 = scalar_select %p706, %s32, 1
          %s708 = scalar_lea.vmem %s15, %s707
        $region80: #{tpu_custom_call.1} parent=63 // pred_fallthru
          _
        // Predicated region
        $region81: #{tpu_custom_call.1} parent=63 // pred_check
          %p709 = pneg %p408
        $region82: #{tpu_custom_call.1} parent=63 // pred_check_branch
          %711 = sbr.rel (%p709) target = $region84
        $region83: #{tpu_custom_call.1} parent=63 // pred_region
          %s712 = sand.u32 %s32, 1
          %s713 = scalar_lea.sflag [#allocation8], %s712
          %s714 = sand.u32 %s398, 1
          %s715 = smul.addr %s714, 64
          %s716 = scalar_lea.vmem [#allocation24], %s715
          %s718 = ssub.s32 1024, 1024
          %719 = vsyncadd %s713, %s718
          %s720 = smul.addr %s32, 16
          %s721 = smul.addr %s720, 64
          %s722 = scalar_lea.hbm %s16, %s721
          %s723 = sshll.u32 %s716, 4
          %s724 = int_to_ptr.vmem [resolvable:$true] %s723
          %729 = dma.hbm_to_vmem [thread:$0]  %s722, 1024, %s724, %s713, 64, 64, 4
        $region84: #{tpu_custom_call.1} parent=63 // pred_fallthru
          _
        // Predicated region
        $region85: #{tpu_custom_call.1} parent=63 // pred_check
          %p730 = pneg %p434
        $region86: #{tpu_custom_call.1} parent=63 // pred_check_branch
          %732 = sbr.rel (%p730) target = $region88
        $region87: #{tpu_custom_call.1} parent=63 // pred_region
          %p733 = scmp.lt.s32.totalorder %s32, 1
          %s734 = scalar_select %p733, %s32, 1
          %s735 = scalar_lea.vmem %s17, %s734
        $region88: #{tpu_custom_call.1} parent=63 // pred_fallthru
          _
        // Predicated region
        $region89: #{tpu_custom_call.1} parent=63 // pred_check
          %p736 = pneg %p460
        $region90: #{tpu_custom_call.1} parent=63 // pred_check_branch
          %738 = sbr.rel (%p736) target = $region92
        $region91: #{tpu_custom_call.1} parent=63 // pred_region
          %s739 = sand.u32 %s32, 1
          %s740 = scalar_lea.sflag [#allocation8], %s739
          %s741 = sand.u32 %s450, 1
          %s742 = smul.addr %s741, 64
          %s743 = scalar_lea.vmem [#allocation25], %s742
          %s745 = ssub.s32 1024, 1024
          %746 = vsyncadd %s740, %s745
          %s747 = smul.addr %s32, 16
          %s748 = smul.addr %s747, 64
          %s749 = scalar_lea.hbm %s18, %s748
          %s750 = sshll.u32 %s743, 4
          %s751 = int_to_ptr.vmem [resolvable:$true] %s750
          %756 = dma.hbm_to_vmem [thread:$0]  %s749, 1024, %s751, %s740, 64, 64, 4
        $region92: #{tpu_custom_call.1} parent=63 // pred_fallthru
          _
        // Predicated region
        $region93: #{tpu_custom_call.1} parent=63 // pred_check
          %p757 = pneg %p486
        $region94: #{tpu_custom_call.1} parent=63 // pred_check_branch
          %759 = sbr.rel (%p757) target = $region96
        $region95: #{tpu_custom_call.1} parent=63 // pred_region
          %p760 = scmp.lt.s32.totalorder %s32, 1
          %s761 = scalar_select %p760, %s32, 1
          %s762 = scalar_lea.vmem %s19, %s761
        $region96: #{tpu_custom_call.1} parent=63 // pred_fallthru
          _
      $region64: #{tpu_custom_call.1} parent=5 // pred_fallthru
        _
      %p763 = scmp.le.s32.totalorder 1, %s32
      %p764 = scmp.lt.s32.totalorder %s32, 3
      %p765 = pnand %p763, %p764
      %p766 = pneg %p765
      // Predicated region
      $region97: #{tpu_custom_call.1} parent=5 // pred_check
        _
      $region98: #{tpu_custom_call.1} parent=5 // pred_check_branch
        %768 = sbr.rel (%p765) target = $region100
      $region99: #{tpu_custom_call.1} parent=5 // pred_region
        %s769 = ssub.s32 %s32, 1
        // Predicated region
        $region101: #{tpu_custom_call.1} parent=99 // pred_check
          %p770 = pneg %p53
        $region102: #{tpu_custom_call.1} parent=99 // pred_check_branch
          %772 = sbr.rel (%p770) target = $region104
        $region103: #{tpu_custom_call.1} parent=99 // pred_region
          %773 = dma.done [#allocation8], 128
        $region104: #{tpu_custom_call.1} parent=99 // pred_fallthru
          _
        // Predicated region
        $region105: #{tpu_custom_call.1} parent=99 // pred_check
          %p774 = pneg %p74
        $region106: #{tpu_custom_call.1} parent=99 // pred_check_branch
          %776 = sbr.rel (%p774) target = $region108
        $region107: #{tpu_custom_call.1} parent=99 // pred_region
          %777 = dma.done [#allocation11], 16
        $region108: #{tpu_custom_call.1} parent=99 // pred_fallthru
          _
        // Predicated region
        $region109: #{tpu_custom_call.1} parent=99 // pred_check
          %p778 = pneg %p137
        $region110: #{tpu_custom_call.1} parent=99 // pred_check_branch
          %780 = sbr.rel (%p778) target = $region112
        $region111: #{tpu_custom_call.1} parent=99 // pred_region
          %781 = dma.done [#allocation11], 1024
        $region112: #{tpu_custom_call.1} parent=99 // pred_fallthru
          _
        // Predicated region
        $region113: #{tpu_custom_call.1} parent=99 // pred_check
          %p782 = pneg %p158
        $region114: #{tpu_custom_call.1} parent=99 // pred_check_branch
          %784 = sbr.rel (%p782) target = $region116
        $region115: #{tpu_custom_call.1} parent=99 // pred_region
          %785 = dma.done [#allocation14], 16
        $region116: #{tpu_custom_call.1} parent=99 // pred_fallthru
          _
        // Predicated region
        $region117: #{tpu_custom_call.1} parent=99 // pred_check
          %p786 = pneg %p179
        $region118: #{tpu_custom_call.1} parent=99 // pred_check_branch
          %788 = sbr.rel (%p786) target = $region120
        $region119: #{tpu_custom_call.1} parent=99 // pred_region
          %789 = dma.done [#allocation14], 1024
        $region120: #{tpu_custom_call.1} parent=99 // pred_fallthru
          _
        // Predicated region
        $region121: #{tpu_custom_call.1} parent=99 // pred_check
          %p790 = pneg %p200
        $region122: #{tpu_custom_call.1} parent=99 // pred_check_branch
          %792 = sbr.rel (%p790) target = $region124
        $region123: #{tpu_custom_call.1} parent=99 // pred_region
          %793 = dma.done [#allocation17], 16
        $region124: #{tpu_custom_call.1} parent=99 // pred_fallthru
          _
        // Predicated region
        $region125: #{tpu_custom_call.1} parent=99 // pred_check
          %p794 = pneg %p242
        $region126: #{tpu_custom_call.1} parent=99 // pred_check_branch
          %796 = sbr.rel (%p794) target = $region128
        $region127: #{tpu_custom_call.1} parent=99 // pred_region
          %797 = dma.done [#allocation17], 16
        $region128: #{tpu_custom_call.1} parent=99 // pred_fallthru
          _
        // Predicated region
        $region129: #{tpu_custom_call.1} parent=99 // pred_check
          %p798 = pneg %p263
        $region130: #{tpu_custom_call.1} parent=99 // pred_check_branch
          %800 = sbr.rel (%p798) target = $region132
        $region131: #{tpu_custom_call.1} parent=99 // pred_region
          %801 = dma.done [#allocation20], 1024
        $region132: #{tpu_custom_call.1} parent=99 // pred_fallthru
          _
        %s802 = sand.u32 %s37, 1
        %s803 = scalar_lea.sflag [#allocation8], %s802
        %s804 = sand.u32 %s297, 1
        %s805 = smul.addr %s804, 64
        %s806 = scalar_lea.vmem [#allocation21], %s805
        // Predicated region
        $region133: #{tpu_custom_call.1} parent=99 // pred_check
          %p807 = pneg %p310
        $region134: #{tpu_custom_call.1} parent=99 // pred_check_branch
          %809 = sbr.rel (%p807) target = $region136
        $region135: #{tpu_custom_call.1} parent=99 // pred_region
          %810 = dma.done %s803, 1024
        $region136: #{tpu_custom_call.1} parent=99 // pred_fallthru
          _
        %s811 = sand.u32 %s37, 1
        %s812 = scalar_lea.sflag [#allocation8], %s811
        %s813 = sand.u32 %s323, 1
        %s814 = smul.addr %s813, 64
        %s815 = scalar_lea.vmem [#allocation22], %s814
        // Predicated region
        $region137: #{tpu_custom_call.1} parent=99 // pred_check
          %p816 = pneg %p336
        $region138: #{tpu_custom_call.1} parent=99 // pred_check_branch
          %818 = sbr.rel (%p816) target = $region140
        $region139: #{tpu_custom_call.1} parent=99 // pred_region
          %819 = dma.done %s812, 1024
        $region140: #{tpu_custom_call.1} parent=99 // pred_fallthru
          _
        %s820 = sand.u32 %s37, 1
        %s821 = scalar_lea.sflag [#allocation8], %s820
        %s822 = sand.u32 %s349, 1
        %s823 = smul.addr %s822, 64
        %s824 = scalar_lea.vmem [#allocation23], %s823
        // Predicated region
        $region141: #{tpu_custom_call.1} parent=99 // pred_check
          %p825 = pneg %p362
        $region142: #{tpu_custom_call.1} parent=99 // pred_check_branch
          %827 = sbr.rel (%p825) target = $region144
        $region143: #{tpu_custom_call.1} parent=99 // pred_region
          %828 = dma.done %s821, 1024
        $region144: #{tpu_custom_call.1} parent=99 // pred_fallthru
          _
        %s829 = sand.u32 %s37, 1
        %s830 = scalar_lea.sflag [#allocation8], %s829
        %s831 = sand.u32 %s401, 1
        %s832 = smul.addr %s831, 64
        %s833 = scalar_lea.vmem [#allocation24], %s832
        // Predicated region
        $region145: #{tpu_custom_call.1} parent=99 // pred_check
          %p834 = pneg %p414
        $region146: #{tpu_custom_call.1} parent=99 // pred_check_branch
          %836 = sbr.rel (%p834) target = $region148
        $region147: #{tpu_custom_call.1} parent=99 // pred_region
          %837 = dma.done %s830, 1024
        $region148: #{tpu_custom_call.1} parent=99 // pred_fallthru
          _
        %s838 = sand.u32 %s37, 1
        %s839 = scalar_lea.sflag [#allocation8], %s838
        %s840 = sand.u32 %s453, 1
        %s841 = smul.addr %s840, 64
        %s842 = scalar_lea.vmem [#allocation25], %s841
        // Predicated region
        $region149: #{tpu_custom_call.1} parent=99 // pred_check
          %p843 = pneg %p466
        $region150: #{tpu_custom_call.1} parent=99 // pred_check_branch
          %845 = sbr.rel (%p843) target = $region152
        $region151: #{tpu_custom_call.1} parent=99 // pred_region
          %846 = dma.done %s839, 1024
        $region152: #{tpu_custom_call.1} parent=99 // pred_fallthru
          _
        %p847 = pneg %p53
        %p848 = pneg %p50
        %p849 = pneg %p74
        %p850 = pneg %p71
        %p851 = pneg %p95
        %p852 = pneg %p92
        %p853 = pneg %p116
        %p854 = pneg %p113
        %p855 = pneg %p137
        %p856 = pneg %p134
        %p857 = pneg %p158
        %p858 = pneg %p155
        %p859 = pneg %p179
        %p860 = pneg %p176
        %p861 = pneg %p200
        %p862 = pneg %p197
        %p863 = pneg %p221
        %p864 = pneg %p218
        %p865 = pneg %p242
        %p866 = pneg %p239
        %p867 = pneg %p263
        %p868 = pneg %p260
        %p869 = pneg %p284
        %p870 = pneg %p281
        %s871 = sand.u32 %s37, 1
        %s872 = scalar_lea.sflag [#allocation8], %s871
        %s873 = sand.u32 %s297, 1
        %s874 = smul.addr %s873, 64
        %s875 = scalar_lea.vmem [#allocation21], %s874
        %p876 = pneg %p310
        %p877 = pneg %p307
        %s878 = sand.u32 %s37, 1
        %s879 = scalar_lea.sflag [#allocation8], %s878
        %s880 = sand.u32 %s323, 1
        %s881 = smul.addr %s880, 64
        %s882 = scalar_lea.vmem [#allocation22], %s881
        %p883 = pneg %p336
        %p884 = pneg %p333
        %s885 = sand.u32 %s37, 1
        %s886 = scalar_lea.sflag [#allocation8], %s885
        %s887 = sand.u32 %s349, 1
        %s888 = smul.addr %s887, 64
        %s889 = scalar_lea.vmem [#allocation23], %s888
        %p890 = pneg %p362
        %p891 = pneg %p359
        %p892 = scmp.lt.s32.totalorder %s37, 1
        %s893 = scalar_select %p892, %s37, 1
        %s894 = scalar_lea.vmem %s15, %s893
        %p895 = pneg %p388
        %p896 = pneg %p385
        %s897 = sand.u32 %s37, 1
        %s898 = scalar_lea.sflag [#allocation8], %s897
        %s899 = sand.u32 %s401, 1
        %s900 = smul.addr %s899, 64
        %s901 = scalar_lea.vmem [#allocation24], %s900
        %p902 = pneg %p414
        %p903 = pneg %p411
        %p904 = scmp.lt.s32.totalorder %s37, 1
        %s905 = scalar_select %p904, %s37, 1
        %s906 = scalar_lea.vmem %s17, %s905
        %p907 = pneg %p440
        %p908 = pneg %p437
        %s909 = sand.u32 %s37, 1
        %s910 = scalar_lea.sflag [#allocation8], %s909
        %s911 = sand.u32 %s453, 1
        %s912 = smul.addr %s911, 64
        %s913 = scalar_lea.vmem [#allocation25], %s912
        %p914 = pneg %p466
        %p915 = pneg %p463
        %p916 = scmp.lt.s32.totalorder %s37, 1
        %s917 = scalar_select %p916, %s37, 1
        %s918 = scalar_lea.vmem %s19, %s917
        %p919 = pneg %p492
        %p920 = pneg %p489
        %p921 = pneg %p513
        %p922 = pneg %p510
        %p923 = scmp.lt.s32.totalorder %s37, 1
        %s924 = scalar_select %p923, %s37, 1
        %s925 = scalar_lea.vmem %s15, %s924
        %p926 = scmp.lt.s32.totalorder %s37, 1
        %s927 = scalar_select %p926, %s37, 1
        %s928 = scalar_lea.vmem %s17, %s927
        %p929 = scmp.lt.s32.totalorder %s37, 1
        %s930 = scalar_select %p929, %s37, 1
        %s931 = scalar_lea.vmem %s19, %s930
        %v933 = vld [vmem:[#allocation7] sm:$0xf]
        %v934 = vld [vmem:[#allocation7 + $0x4] sm:$0xf]
        %p935 = scmp.eq.s32.totalorder %s37, 0
        // Predicated region
        $region153: #{tpu_custom_call.1} parent=99 // pred_check
          %p936 = pneg %p935
        $region154: #{tpu_custom_call.1} parent=99 // pred_check_branch
          %938 = sbr.rel (%p936) target = $region156
        $region155: #{tpu_custom_call.1} parent=99 // pred_region
          %v939 = vlaneseq
          %v940 = vshrl.u32 %v939, 7
          %v941 = vld [vmem:[#allocation10] sm:$0x1]
          %v942 = vlaneseq
          %v943 = vshrl.u32 %v942, 7
          %v944 = vsub.s32 0, %v943
          %v945 = vrot.slane %v941, %v944
          %vm946 = vcmp.eq.s32.totalorder %v940, %v945
          %v947 = vsel %vm946, 1, 0
          %v948 = vcvt.s32.f32 %v947
          %v949 = vpack.c.bf16 %v948, %v948
          %vm950 = vcmask 125952
          %951 = vst.msk [vmem:[#allocation4] sm:$0xf] %vm950, %v949
          %v952 = vlaneseq
          %v953 = vand.u32 %v952, 127
          %v954 = vld [vmem:[%s2] sm:$0xff]
          %v955 = vld [vmem:[%s2 + $0x8] sm:$0xff]
          %956 = vset.pattern.permute.xlu0 0
          %957 = vperm.xlu0 %956, %v954
          %v958 = vpop.permute.xlu0 %957
          %959 = vset.pattern.permute.xlu0 0
          %960 = vperm.xlu0 %959, %v955
          %v961 = vpop.permute.xlu0 %960
          %vm962 = vcmp.eq.s32.totalorder %v953, %v958
          %vm963 = vcmp.eq.s32.totalorder %v953, %v961
          %v964 = vld [vmem:[%s3] sm:$0xff]
          %v965 = vld [vmem:[%s3 + $0x8] sm:$0xff]
          %v966 = vadd.s32 %v964, 8
          %v967 = vadd.s32 %v965, 8
          %968 = vset.pattern.permute.xlu0 0
          %969 = vperm.xlu0 %968, %v966
          %v970 = vpop.permute.xlu0 %969
          %971 = vset.pattern.permute.xlu0 0
          %972 = vperm.xlu0 %971, %v967
          %v973 = vpop.permute.xlu0 %972
          %vm974 = vcmp.eq.s32.totalorder %v953, %v970
          %vm975 = vcmp.eq.s32.totalorder %v953, %v973
          %vm976 = vmor %vm962, %vm974
          %vm977 = vmor %vm963, %vm975
          %v978 = vsel %vm976, 1, 0
          %v979 = vsel %vm977, 1, 0
          %v980 = vcvt.s32.f32 %v978
          %v981 = vcvt.s32.f32 %v979
          %v982 = vpack.c.bf16 %v981, %v980
          %vm983 = vcmask 130048
          %984 = vst.msk [vmem:[#allocation5] sm:$0xff] %vm983, %v982
          %v985 = vsel %vm983, %v948, 0.0
          %986 = vadd.xlane.f32.xlu0 %v985
          %v987 = vpop.xlane.xlu0 %986
          %vm988 = vcmp.gt.f32.partialorder %v987, 0.0
          %v989 = vmax.f32 %v987, 1.0
          %v990 = vrcp.pop %v989
          %v991 = vmul.f32 1.0, %v990
          %v992 = vsel %vm988, %v991, 0.0
          %vm993 = vcmask 7168
          %994 = vst.msk [vmem:[#allocation3] sm:$0xff] %vm993, %v992
          %v995 = vld [vmem:[#allocation12] sm:$0xf]
          %v996 = vld [vmem:[#allocation12 + $0x4] sm:$0xf]
          %v997 = vld [vmem:[#allocation12 + $0x8] sm:$0xf]
          %v998 = vld [vmem:[#allocation12 + $0xc] sm:$0xf]
          %v999 = vld [vmem:[#allocation12 + $0x10] sm:$0xf]
          %v1000 = vld [vmem:[#allocation12 + $0x14] sm:$0xf]
          %v1001 = vld [vmem:[#allocation12 + $0x18] sm:$0xf]
          %v1002 = vld [vmem:[#allocation12 + $0x1c] sm:$0xf]
          %v1003 = vld [vmem:[#allocation12 + $0x20] sm:$0xf]
          %v1004 = vld [vmem:[#allocation12 + $0x24] sm:$0xf]
          %v1005 = vld [vmem:[#allocation12 + $0x28] sm:$0xf]
          %v1006 = vld [vmem:[#allocation12 + $0x2c] sm:$0xf]
          %v1007 = vld [vmem:[#allocation12 + $0x30] sm:$0xf]
          %v1008 = vld [vmem:[#allocation12 + $0x34] sm:$0xf]
          %v1009 = vld [vmem:[#allocation12 + $0x38] sm:$0xf]
          %v1010 = vld [vmem:[#allocation12 + $0x3c] sm:$0xf]
          %v1011 = vld [vmem:[#allocation13] sm:$0x1]
          %v1013 = vlaneseq
          %v1014 = vshrl.u32 %v1013, 7
          %v1015 = vsub.s32 0, %v1014
          %v1016 = vrot.slane %v1011, %v1015
          %v1020 = vunpack.c.l.b16 %v933
          %v1021 = vunpack.c.l.b16 %v934
          %v1022 = vpack.c.b16 %v1021, %v1020
          %v1040 = vunpack.c.l.b16 %v995
          %v1041 = vunpack.c.l.b16 %v996
          %v1042 = vunpack.c.l.b16 %v997
          %v1043 = vunpack.c.l.b16 %v998
          %v1044 = vunpack.c.l.b16 %v999
          %v1045 = vunpack.c.l.b16 %v1000
          %v1046 = vunpack.c.l.b16 %v1001
          %v1047 = vunpack.c.l.b16 %v1002
          %v1048 = vunpack.c.l.b16 %v1003
          %v1049 = vunpack.c.l.b16 %v1004
          %v1050 = vunpack.c.l.b16 %v1005
          %v1051 = vunpack.c.l.b16 %v1006
          %v1052 = vunpack.c.l.b16 %v1007
          %v1053 = vunpack.c.l.b16 %v1008
          %v1054 = vunpack.c.l.b16 %v1009
          %v1055 = vunpack.c.l.b16 %v1010
          %v1056 = vpack.c.b16 %v1041, %v1040
          %v1057 = vpack.c.b16 %v1043, %v1042
          %v1058 = vpack.c.b16 %v1045, %v1044
          %v1059 = vpack.c.b16 %v1047, %v1046
          %v1060 = vpack.c.b16 %v1049, %v1048
          %v1061 = vpack.c.b16 %v1051, %v1050
          %v1062 = vpack.c.b16 %v1053, %v1052
          %v1063 = vpack.c.b16 %v1055, %v1054
          %1072 = vmatprep.subr.bf16.mxu0 0
          %1073 = vmatpush1.bf16.msra.mxu0 %v1056
          %1074 = vmatprep.subr.bf16.mxu0 0
          %1075 = vmatpush1.bf16.msra.mxu0 %v1057
          %1076 = vmatprep.subr.bf16.mxu0 0
          %1077 = vmatpush1.bf16.msra.mxu0 %v1058
          %1078 = vmatprep.subr.bf16.mxu0 0
          %1079 = vmatpush1.bf16.msra.mxu0 %v1059
          %1080 = vmatprep.subr.bf16.mxu0 0
          %1081 = vmatpush1.bf16.msra.mxu0 %v1060
          %1082 = vmatprep.subr.bf16.mxu0 0
          %1083 = vmatpush1.bf16.msra.mxu0 %v1061
          %1084 = vmatprep.subr.bf16.mxu0 0
          %1085 = vmatpush1.bf16.msra.mxu0 %v1062
          %1086 = vmatprep.subr.bf16.mxu0 0
          %1087 = vmatpush1.bf16.msra.mxu0 %v1063
          %1088 = vmatprep.subr.bf16.mxu0 0
          %1089 = vmatpush1.bf16.msra.mxu0 0
          %1090 = vmatprep.subr.bf16.mxu0 0
          %1091 = vmatpush1.bf16.msra.mxu0 0
          %1092 = vmatprep.subr.bf16.mxu0 0
          %1093 = vmatpush1.bf16.msra.mxu0 0
          %1094 = vmatprep.subr.bf16.mxu0 0
          %1095 = vmatpush1.bf16.msra.mxu0 0
          %1096 = vmatprep.subr.bf16.mxu0 0
          %1097 = vmatpush1.bf16.msra.mxu0 0
          %1098 = vmatprep.subr.bf16.mxu0 0
          %1099 = vmatpush1.bf16.msra.mxu0 0
          %1100 = vmatprep.subr.bf16.mxu0 0
          %1101 = vmatpush1.bf16.msra.mxu0 0
          %1102 = vmatprep.subr.bf16.mxu0 0
          %1103 = vmatpush1.bf16.msra.mxu0 0
          %1104 = vmatprep.mubr.bf16.mxu0 0
          %1105 = vmatmul.mubr.bf16.gmra.mrb[0].mxu0 %v1022
          %v1106 = vpop.f32.mrb[0].mxu0
          %v1107 = vadd.f32 %v1016, %v1106
          %v1108 = vpop.f32.mrb[0].mxu0
          %v1109 = vpop.f32.mrb[0].mxu0
          %v1110 = vadd.f32 %v1016, %v1109
          %v1111 = vpop.f32.mrb[0].mxu0
          %1112 = vdwg.mxu0
          %v1113 = vmax.f32 %v1107, 0.0
          %v1114 = vmax.f32 %v1110, 0.0
          %v1115 = vld [vmem:[#allocation15] sm:$0xf]
          %v1116 = vld [vmem:[#allocation15 + $0x4] sm:$0xf]
          %v1117 = vld [vmem:[#allocation15 + $0x8] sm:$0xf]
          %v1118 = vld [vmem:[#allocation15 + $0xc] sm:$0xf]
          %v1119 = vld [vmem:[#allocation15 + $0x10] sm:$0xf]
          %v1120 = vld [vmem:[#allocation15 + $0x14] sm:$0xf]
          %v1121 = vld [vmem:[#allocation15 + $0x18] sm:$0xf]
          %v1122 = vld [vmem:[#allocation15 + $0x1c] sm:$0xf]
          %v1123 = vld [vmem:[#allocation15 + $0x20] sm:$0xf]
          %v1124 = vld [vmem:[#allocation15 + $0x24] sm:$0xf]
          %v1125 = vld [vmem:[#allocation15 + $0x28] sm:$0xf]
          %v1126 = vld [vmem:[#allocation15 + $0x2c] sm:$0xf]
          %v1127 = vld [vmem:[#allocation15 + $0x30] sm:$0xf]
          %v1128 = vld [vmem:[#allocation15 + $0x34] sm:$0xf]
          %v1129 = vld [vmem:[#allocation15 + $0x38] sm:$0xf]
          %v1130 = vld [vmem:[#allocation15 + $0x3c] sm:$0xf]
          %v1131 = vld [vmem:[#allocation16] sm:$0x1]
          %v1132 = vpack.c.bf16 %v1114, %v1113
          %v1134 = vlaneseq
          %v1135 = vshrl.u32 %v1134, 7
          %v1136 = vsub.s32 0, %v1135
          %v1137 = vrot.slane %v1131, %v1136
          %v1155 = vunpack.c.l.b16 %v1115
          %v1156 = vunpack.c.l.b16 %v1116
          %v1157 = vunpack.c.l.b16 %v1117
          %v1158 = vunpack.c.l.b16 %v1118
          %v1159 = vunpack.c.l.b16 %v1119
          %v1160 = vunpack.c.l.b16 %v1120
          %v1161 = vunpack.c.l.b16 %v1121
          %v1162 = vunpack.c.l.b16 %v1122
          %v1163 = vunpack.c.l.b16 %v1123
          %v1164 = vunpack.c.l.b16 %v1124
          %v1165 = vunpack.c.l.b16 %v1125
          %v1166 = vunpack.c.l.b16 %v1126
          %v1167 = vunpack.c.l.b16 %v1127
          %v1168 = vunpack.c.l.b16 %v1128
          %v1169 = vunpack.c.l.b16 %v1129
          %v1170 = vunpack.c.l.b16 %v1130
          %v1171 = vpack.c.b16 %v1156, %v1155
          %v1172 = vpack.c.b16 %v1158, %v1157
          %v1173 = vpack.c.b16 %v1160, %v1159
          %v1174 = vpack.c.b16 %v1162, %v1161
          %v1175 = vpack.c.b16 %v1164, %v1163
          %v1176 = vpack.c.b16 %v1166, %v1165
          %v1177 = vpack.c.b16 %v1168, %v1167
          %v1178 = vpack.c.b16 %v1170, %v1169
          %1187 = vmatprep.subr.bf16.mxu0 0
          %1188 = vmatpush1.bf16.msra.mxu0 %v1171
          %1189 = vmatprep.subr.bf16.mxu0 0
          %1190 = vmatpush1.bf16.msra.mxu0 %v1172
          %1191 = vmatprep.subr.bf16.mxu0 0
          %1192 = vmatpush1.bf16.msra.mxu0 %v1173
          %1193 = vmatprep.subr.bf16.mxu0 0
          %1194 = vmatpush1.bf16.msra.mxu0 %v1174
          %1195 = vmatprep.subr.bf16.mxu0 0
          %1196 = vmatpush1.bf16.msra.mxu0 %v1175
          %1197 = vmatprep.subr.bf16.mxu0 0
          %1198 = vmatpush1.bf16.msra.mxu0 %v1176
          %1199 = vmatprep.subr.bf16.mxu0 0
          %1200 = vmatpush1.bf16.msra.mxu0 %v1177
          %1201 = vmatprep.subr.bf16.mxu0 0
          %1202 = vmatpush1.bf16.msra.mxu0 %v1178
          %1203 = vmatprep.subr.bf16.mxu0 0
          %1204 = vmatpush1.bf16.msra.mxu0 0
          %1205 = vmatprep.subr.bf16.mxu0 0
          %1206 = vmatpush1.bf16.msra.mxu0 0
          %1207 = vmatprep.subr.bf16.mxu0 0
          %1208 = vmatpush1.bf16.msra.mxu0 0
          %1209 = vmatprep.subr.bf16.mxu0 0
          %1210 = vmatpush1.bf16.msra.mxu0 0
          %1211 = vmatprep.subr.bf16.mxu0 0
          %1212 = vmatpush1.bf16.msra.mxu0 0
          %1213 = vmatprep.subr.bf16.mxu0 0
          %1214 = vmatpush1.bf16.msra.mxu0 0
          %1215 = vmatprep.subr.bf16.mxu0 0
          %1216 = vmatpush1.bf16.msra.mxu0 0
          %1217 = vmatprep.subr.bf16.mxu0 0
          %1218 = vmatpush1.bf16.msra.mxu0 0
          %1219 = vmatprep.mubr.bf16.mxu0 0
          %1220 = vmatmul.mubr.bf16.gmra.mrb[0].mxu0 %v1132
          %v1221 = vpop.f32.mrb[0].mxu0
          %v1222 = vadd.f32 %v1137, %v1221
          %v1223 = vpop.f32.mrb[0].mxu0
          %v1224 = vpop.f32.mrb[0].mxu0
          %v1225 = vadd.f32 %v1137, %v1224
          %v1226 = vpop.f32.mrb[0].mxu0
          %1227 = vdwg.mxu0
          %v1228 = vld [vmem:[#allocation4] sm:$0xf]
          %v1229 = vpack.c.bf16 %v1225, %v1222
          %v1231 = vsel %vm983, %v1228, 0
          %1233 = vmatprep.subr.bf16.mxu0 0
          %1234 = vmatpush1.bf16.msra.mxu0 %v1229
          %1235 = vmatprep.subr.bf16.mxu0 0
          %1236 = vmatpush1.bf16.msra.mxu0 0
          %1237 = vmatprep.subr.bf16.mxu0 0
          %1238 = vmatpush1.bf16.msra.mxu0 0
          %1239 = vmatprep.subr.bf16.mxu0 0
          %1240 = vmatpush1.bf16.msra.mxu0 0
          %1241 = vmatprep.subr.bf16.mxu0 0
          %1242 = vmatpush1.bf16.msra.mxu0 0
          %1243 = vmatprep.subr.bf16.mxu0 0
          %1244 = vmatpush1.bf16.msra.mxu0 0
          %1245 = vmatprep.subr.bf16.mxu0 0
          %1246 = vmatpush1.bf16.msra.mxu0 0
          %1247 = vmatprep.subr.bf16.mxu0 0
          %1248 = vmatpush1.bf16.msra.mxu0 0
          %1249 = vmatprep.subr.bf16.mxu0 0
          %1250 = vmatpush1.bf16.msra.mxu0 0
          %1251 = vmatprep.subr.bf16.mxu0 0
          %1252 = vmatpush1.bf16.msra.mxu0 0
          %1253 = vmatprep.subr.bf16.mxu0 0
          %1254 = vmatpush1.bf16.msra.mxu0 0
          %1255 = vmatprep.subr.bf16.mxu0 0
          %1256 = vmatpush1.bf16.msra.mxu0 0
          %1257 = vmatprep.subr.bf16.mxu0 0
          %1258 = vmatpush1.bf16.msra.mxu0 0
          %1259 = vmatprep.subr.bf16.mxu0 0
          %1260 = vmatpush1.bf16.msra.mxu0 0
          %1261 = vmatprep.subr.bf16.mxu0 0
          %1262 = vmatpush1.bf16.msra.mxu0 0
          %1263 = vmatprep.subr.bf16.mxu0 0
          %1264 = vmatpush1.bf16.msra.mxu0 0
          %1265 = vmatprep.mubr.bf16.mxu0 0
          %1266 = vmatmul.mubr.bf16.gmra.mrb[0].mxu0 %v1231
          %v1267 = vpop.f32.mrb[0].mxu0
          %v1268 = vadd.f32 0.0, %v1267
          %v1269 = vpop.f32.mrb[0].mxu0
          %v1270 = vpop.f32.mrb[0].mxu0
          %v1271 = vpop.f32.mrb[0].mxu0
          %1272 = vdwg.mxu0
          %1273 = vst [vmem:[#allocation2] sm:$0xff] %v1268
        $region156: #{tpu_custom_call.1} parent=99 // pred_fallthru
          _
        %v1274 = vld [vmem:[#allocation2] sm:$0xff]
        %v1275 = vld [vmem:[%s806] sm:$0xf]
        %v1276 = vld [vmem:[%s806 + $0x4] sm:$0xf]
        %v1277 = vld [vmem:[%s806 + $0x8] sm:$0xf]
        %v1278 = vld [vmem:[%s806 + $0xc] sm:$0xf]
        %v1279 = vld [vmem:[%s806 + $0x10] sm:$0xf]
        %v1280 = vld [vmem:[%s806 + $0x14] sm:$0xf]
        %v1281 = vld [vmem:[%s806 + $0x18] sm:$0xf]
        %v1282 = vld [vmem:[%s806 + $0x1c] sm:$0xf]
        %v1283 = vld [vmem:[%s806 + $0x20] sm:$0xf]
        %v1284 = vld [vmem:[%s806 + $0x24] sm:$0xf]
        %v1285 = vld [vmem:[%s806 + $0x28] sm:$0xf]
        %v1286 = vld [vmem:[%s806 + $0x2c] sm:$0xf]
        %v1287 = vld [vmem:[%s806 + $0x30] sm:$0xf]
        %v1288 = vld [vmem:[%s806 + $0x34] sm:$0xf]
        %v1289 = vld [vmem:[%s806 + $0x38] sm:$0xf]
        %v1290 = vld [vmem:[%s806 + $0x3c] sm:$0xf]
        %v1291 = vpack.c.bf16 %v1274, %v1274
        %v1308 = vunpack.c.l.b16 %v1275
        %v1309 = vunpack.c.l.b16 %v1276
        %v1310 = vunpack.c.l.b16 %v1277
        %v1311 = vunpack.c.l.b16 %v1278
        %v1312 = vunpack.c.l.b16 %v1279
        %v1313 = vunpack.c.l.b16 %v1280
        %v1314 = vunpack.c.l.b16 %v1281
        %v1315 = vunpack.c.l.b16 %v1282
        %v1316 = vunpack.c.l.b16 %v1283
        %v1317 = vunpack.c.l.b16 %v1284
        %v1318 = vunpack.c.l.b16 %v1285
        %v1319 = vunpack.c.l.b16 %v1286
        %v1320 = vunpack.c.l.b16 %v1287
        %v1321 = vunpack.c.l.b16 %v1288
        %v1322 = vunpack.c.l.b16 %v1289
        %v1323 = vunpack.c.l.b16 %v1290
        %v1324 = vpack.c.b16 %v1309, %v1308
        %v1325 = vpack.c.b16 %v1311, %v1310
        %v1326 = vpack.c.b16 %v1313, %v1312
        %v1327 = vpack.c.b16 %v1315, %v1314
        %v1328 = vpack.c.b16 %v1317, %v1316
        %v1329 = vpack.c.b16 %v1319, %v1318
        %v1330 = vpack.c.b16 %v1321, %v1320
        %v1331 = vpack.c.b16 %v1323, %v1322
        %1340 = vmatprep.subr.bf16.mxu0 0
        %1341 = vmatpush1.bf16.msra.mxu0 %v1324
        %1342 = vmatprep.subr.bf16.mxu0 0
        %1343 = vmatpush1.bf16.msra.mxu0 %v1325
        %1344 = vmatprep.subr.bf16.mxu0 0
        %1345 = vmatpush1.bf16.msra.mxu0 %v1326
        %1346 = vmatprep.subr.bf16.mxu0 0
        %1347 = vmatpush1.bf16.msra.mxu0 %v1327
        %1348 = vmatprep.subr.bf16.mxu0 0
        %1349 = vmatpush1.bf16.msra.mxu0 %v1328
        %1350 = vmatprep.subr.bf16.mxu0 0
        %1351 = vmatpush1.bf16.msra.mxu0 %v1329
        %1352 = vmatprep.subr.bf16.mxu0 0
        %1353 = vmatpush1.bf16.msra.mxu0 %v1330
        %1354 = vmatprep.subr.bf16.mxu0 0
        %1355 = vmatpush1.bf16.msra.mxu0 %v1331
        %1356 = vmatprep.subr.bf16.mxu0 0
        %1357 = vmatpush1.bf16.msra.mxu0 0
        %1358 = vmatprep.subr.bf16.mxu0 0
        %1359 = vmatpush1.bf16.msra.mxu0 0
        %1360 = vmatprep.subr.bf16.mxu0 0
        %1361 = vmatpush1.bf16.msra.mxu0 0
        %1362 = vmatprep.subr.bf16.mxu0 0
        %1363 = vmatpush1.bf16.msra.mxu0 0
        %1364 = vmatprep.subr.bf16.mxu0 0
        %1365 = vmatpush1.bf16.msra.mxu0 0
        %1366 = vmatprep.subr.bf16.mxu0 0
        %1367 = vmatpush1.bf16.msra.mxu0 0
        %1368 = vmatprep.subr.bf16.mxu0 0
        %1369 = vmatpush1.bf16.msra.mxu0 0
        %1370 = vmatprep.subr.bf16.mxu0 0
        %1371 = vmatpush1.bf16.msra.mxu0 0
        %1372 = vmatprep.mubr.bf16.mxu0 0
        %1373 = vmatmul.mubr.bf16.gmra.mrb[0].mxu0 %v1291
        %v1374 = vpop.f32.mrb[0].mxu0
        %v1375 = vadd.f32 0.0, %v1374
        %v1376 = vpop.f32.mrb[0].mxu0
        %v1377 = vpop.f32.mrb[0].mxu0
        %v1378 = vpop.f32.mrb[0].mxu0
        %1379 = vdwg.mxu0
        %1380 = vst [vmem:[#allocation6] sm:$0xff] %v1375
        %v1381 = vld [vmem:[%s815] sm:$0xf]
        %v1382 = vld [vmem:[%s815 + $0x4] sm:$0xf]
        %v1383 = vld [vmem:[%s815 + $0x8] sm:$0xf]
        %v1384 = vld [vmem:[%s815 + $0xc] sm:$0xf]
        %v1385 = vld [vmem:[%s815 + $0x10] sm:$0xf]
        %v1386 = vld [vmem:[%s815 + $0x14] sm:$0xf]
        %v1387 = vld [vmem:[%s815 + $0x18] sm:$0xf]
        %v1388 = vld [vmem:[%s815 + $0x1c] sm:$0xf]
        %v1389 = vld [vmem:[%s815 + $0x20] sm:$0xf]
        %v1390 = vld [vmem:[%s815 + $0x24] sm:$0xf]
        %v1391 = vld [vmem:[%s815 + $0x28] sm:$0xf]
        %v1392 = vld [vmem:[%s815 + $0x2c] sm:$0xf]
        %v1393 = vld [vmem:[%s815 + $0x30] sm:$0xf]
        %v1394 = vld [vmem:[%s815 + $0x34] sm:$0xf]
        %v1395 = vld [vmem:[%s815 + $0x38] sm:$0xf]
        %v1396 = vld [vmem:[%s815 + $0x3c] sm:$0xf]
        %v1413 = vunpack.c.l.b16 %v1381
        %v1414 = vunpack.c.l.b16 %v1382
        %v1415 = vunpack.c.l.b16 %v1383
        %v1416 = vunpack.c.l.b16 %v1384
        %v1417 = vunpack.c.l.b16 %v1385
        %v1418 = vunpack.c.l.b16 %v1386
        %v1419 = vunpack.c.l.b16 %v1387
        %v1420 = vunpack.c.l.b16 %v1388
        %v1421 = vunpack.c.l.b16 %v1389
        %v1422 = vunpack.c.l.b16 %v1390
        %v1423 = vunpack.c.l.b16 %v1391
        %v1424 = vunpack.c.l.b16 %v1392
        %v1425 = vunpack.c.l.b16 %v1393
        %v1426 = vunpack.c.l.b16 %v1394
        %v1427 = vunpack.c.l.b16 %v1395
        %v1428 = vunpack.c.l.b16 %v1396
        %v1429 = vpack.c.b16 %v1414, %v1413
        %v1430 = vpack.c.b16 %v1416, %v1415
        %v1431 = vpack.c.b16 %v1418, %v1417
        %v1432 = vpack.c.b16 %v1420, %v1419
        %v1433 = vpack.c.b16 %v1422, %v1421
        %v1434 = vpack.c.b16 %v1424, %v1423
        %v1435 = vpack.c.b16 %v1426, %v1425
        %v1436 = vpack.c.b16 %v1428, %v1427
        %1445 = vmatprep.subr.bf16.mxu0 0
        %1446 = vmatpush1.bf16.msra.mxu0 %v1429
        %1447 = vmatprep.subr.bf16.mxu0 0
        %1448 = vmatpush1.bf16.msra.mxu0 %v1430
        %1449 = vmatprep.subr.bf16.mxu0 0
        %1450 = vmatpush1.bf16.msra.mxu0 %v1431
        %1451 = vmatprep.subr.bf16.mxu0 0
        %1452 = vmatpush1.bf16.msra.mxu0 %v1432
        %1453 = vmatprep.subr.bf16.mxu0 0
        %1454 = vmatpush1.bf16.msra.mxu0 %v1433
        %1455 = vmatprep.subr.bf16.mxu0 0
        %1456 = vmatpush1.bf16.msra.mxu0 %v1434
        %1457 = vmatprep.subr.bf16.mxu0 0
        %1458 = vmatpush1.bf16.msra.mxu0 %v1435
        %1459 = vmatprep.subr.bf16.mxu0 0
        %1460 = vmatpush1.bf16.msra.mxu0 %v1436
        %1461 = vmatprep.subr.bf16.mxu0 0
        %1462 = vmatpush1.bf16.msra.mxu0 0
        %1463 = vmatprep.subr.bf16.mxu0 0
        %1464 = vmatpush1.bf16.msra.mxu0 0
        %1465 = vmatprep.subr.bf16.mxu0 0
        %1466 = vmatpush1.bf16.msra.mxu0 0
        %1467 = vmatprep.subr.bf16.mxu0 0
        %1468 = vmatpush1.bf16.msra.mxu0 0
        %1469 = vmatprep.subr.bf16.mxu0 0
        %1470 = vmatpush1.bf16.msra.mxu0 0
        %1471 = vmatprep.subr.bf16.mxu0 0
        %1472 = vmatpush1.bf16.msra.mxu0 0
        %1473 = vmatprep.subr.bf16.mxu0 0
        %1474 = vmatpush1.bf16.msra.mxu0 0
        %1475 = vmatprep.subr.bf16.mxu0 0
        %1476 = vmatpush1.bf16.msra.mxu0 0
        %1477 = vmatprep.mubr.bf16.mxu0 0
        %1478 = vmatmul.mubr.bf16.gmra.mrb[0].mxu0 %v1291
        %v1479 = vpop.f32.mrb[0].mxu0
        %v1480 = vadd.f32 0.0, %v1479
        %v1481 = vpop.f32.mrb[0].mxu0
        %v1482 = vpop.f32.mrb[0].mxu0
        %v1483 = vpop.f32.mrb[0].mxu0
        %1484 = vdwg.mxu0
        %1485 = vst [vmem:[#allocation6 + $0x8] sm:$0xff] %v1480
        %v1486 = vld [vmem:[#allocation5] sm:$0xff]
        %v1487 = vld [vmem:[#allocation6] sm:$0xff]
        %v1488 = vld [vmem:[#allocation6 + $0x8] sm:$0xff]
        %v1489 = vpack.c.bf16 %v1488, %v1487
        %v1490 = vld [vmem:[%s824] sm:$0xf]
        %v1491 = vld [vmem:[%s824 + $0x4] sm:$0xf]
        %v1492 = vld [vmem:[%s824 + $0x8] sm:$0xf]
        %v1493 = vld [vmem:[%s824 + $0xc] sm:$0xf]
        %v1494 = vld [vmem:[%s824 + $0x10] sm:$0xf]
        %v1495 = vld [vmem:[%s824 + $0x14] sm:$0xf]
        %v1496 = vld [vmem:[%s824 + $0x18] sm:$0xf]
        %v1497 = vld [vmem:[%s824 + $0x1c] sm:$0xf]
        %v1498 = vld [vmem:[%s824 + $0x20] sm:$0xf]
        %v1499 = vld [vmem:[%s824 + $0x24] sm:$0xf]
        %v1500 = vld [vmem:[%s824 + $0x28] sm:$0xf]
        %v1501 = vld [vmem:[%s824 + $0x2c] sm:$0xf]
        %v1502 = vld [vmem:[%s824 + $0x30] sm:$0xf]
        %v1503 = vld [vmem:[%s824 + $0x34] sm:$0xf]
        %v1504 = vld [vmem:[%s824 + $0x38] sm:$0xf]
        %v1505 = vld [vmem:[%s824 + $0x3c] sm:$0xf]
        %v1506 = vld [vmem:[%s925] sm:$0x1]
        %v1508 = vlaneseq
        %v1509 = vshrl.u32 %v1508, 7
        %v1510 = vsub.s32 0, %v1509
        %v1511 = vrot.slane %v1506, %v1510
        %v1515 = vunpack.c.l.b16 %v933
        %v1516 = vunpack.c.l.b16 %v934
        %v1517 = vpack.c.b16 %v1516, %v1515
        %v1535 = vunpack.c.l.b16 %v1490
        %v1536 = vunpack.c.l.b16 %v1491
        %v1537 = vunpack.c.l.b16 %v1492
        %v1538 = vunpack.c.l.b16 %v1493
        %v1539 = vunpack.c.l.b16 %v1494
        %v1540 = vunpack.c.l.b16 %v1495
        %v1541 = vunpack.c.l.b16 %v1496
        %v1542 = vunpack.c.l.b16 %v1497
        %v1543 = vunpack.c.l.b16 %v1498
        %v1544 = vunpack.c.l.b16 %v1499
        %v1545 = vunpack.c.l.b16 %v1500
        %v1546 = vunpack.c.l.b16 %v1501
        %v1547 = vunpack.c.l.b16 %v1502
        %v1548 = vunpack.c.l.b16 %v1503
        %v1549 = vunpack.c.l.b16 %v1504
        %v1550 = vunpack.c.l.b16 %v1505
        %v1551 = vpack.c.b16 %v1536, %v1535
        %v1552 = vpack.c.b16 %v1538, %v1537
        %v1553 = vpack.c.b16 %v1540, %v1539
        %v1554 = vpack.c.b16 %v1542, %v1541
        %v1555 = vpack.c.b16 %v1544, %v1543
        %v1556 = vpack.c.b16 %v1546, %v1545
        %v1557 = vpack.c.b16 %v1548, %v1547
        %v1558 = vpack.c.b16 %v1550, %v1549
        %1567 = vmatprep.subr.bf16.mxu0 0
        %1568 = vmatpush1.bf16.msra.mxu0 %v1551
        %1569 = vmatprep.subr.bf16.mxu0 0
        %1570 = vmatpush1.bf16.msra.mxu0 %v1552
        %1571 = vmatprep.subr.bf16.mxu0 0
        %1572 = vmatpush1.bf16.msra.mxu0 %v1553
        %1573 = vmatprep.subr.bf16.mxu0 0
        %1574 = vmatpush1.bf16.msra.mxu0 %v1554
        %1575 = vmatprep.subr.bf16.mxu0 0
        %1576 = vmatpush1.bf16.msra.mxu0 %v1555
        %1577 = vmatprep.subr.bf16.mxu0 0
        %1578 = vmatpush1.bf16.msra.mxu0 %v1556
        %1579 = vmatprep.subr.bf16.mxu0 0
        %1580 = vmatpush1.bf16.msra.mxu0 %v1557
        %1581 = vmatprep.subr.bf16.mxu0 0
        %1582 = vmatpush1.bf16.msra.mxu0 %v1558
        %1583 = vmatprep.subr.bf16.mxu0 0
        %1584 = vmatpush1.bf16.msra.mxu0 0
        %1585 = vmatprep.subr.bf16.mxu0 0
        %1586 = vmatpush1.bf16.msra.mxu0 0
        %1587 = vmatprep.subr.bf16.mxu0 0
        %1588 = vmatpush1.bf16.msra.mxu0 0
        %1589 = vmatprep.subr.bf16.mxu0 0
        %1590 = vmatpush1.bf16.msra.mxu0 0
        %1591 = vmatprep.subr.bf16.mxu0 0
        %1592 = vmatpush1.bf16.msra.mxu0 0
        %1593 = vmatprep.subr.bf16.mxu0 0
        %1594 = vmatpush1.bf16.msra.mxu0 0
        %1595 = vmatprep.subr.bf16.mxu0 0
        %1596 = vmatpush1.bf16.msra.mxu0 0
        %1597 = vmatprep.subr.bf16.mxu0 0
        %1598 = vmatpush1.bf16.msra.mxu0 0
        %1599 = vmatprep.mubr.bf16.mxu0 0
        %1600 = vmatmul.mubr.bf16.gmra.mrb[0].mxu0 %v1517
        %v1601 = vpop.f32.mrb[0].mxu0
        %v1602 = vadd.f32 %v1511, %v1601
        %v1603 = vpop.f32.mrb[0].mxu0
        %v1604 = vpop.f32.mrb[0].mxu0
        %v1605 = vadd.f32 %v1511, %v1604
        %v1606 = vpop.f32.mrb[0].mxu0
        %1607 = vdwg.mxu0
        %vm1608 = vcmask 130048
        %v1610 = vsel %vm1608, %v1486, 0
        %1612 = vmatprep.subr.bf16.mxu0 0
        %1613 = vmatpush1.bf16.msra.mxu0 %v1489
        %1614 = vmatprep.subr.bf16.mxu0 0
        %1615 = vmatpush1.bf16.msra.mxu0 0
        %1616 = vmatprep.subr.bf16.mxu0 0
        %1617 = vmatpush1.bf16.msra.mxu0 0
        %1618 = vmatprep.subr.bf16.mxu0 0
        %1619 = vmatpush1.bf16.msra.mxu0 0
        %1620 = vmatprep.subr.bf16.mxu0 0
        %1621 = vmatpush1.bf16.msra.mxu0 0
        %1622 = vmatprep.subr.bf16.mxu0 0
        %1623 = vmatpush1.bf16.msra.mxu0 0
        %1624 = vmatprep.subr.bf16.mxu0 0
        %1625 = vmatpush1.bf16.msra.mxu0 0
        %1626 = vmatprep.subr.bf16.mxu0 0
        %1627 = vmatpush1.bf16.msra.mxu0 0
        %1628 = vmatprep.subr.bf16.mxu0 0
        %1629 = vmatpush1.bf16.msra.mxu0 0
        %1630 = vmatprep.subr.bf16.mxu0 0
        %1631 = vmatpush1.bf16.msra.mxu0 0
        %1632 = vmatprep.subr.bf16.mxu0 0
        %1633 = vmatpush1.bf16.msra.mxu0 0
        %1634 = vmatprep.subr.bf16.mxu0 0
        %1635 = vmatpush1.bf16.msra.mxu0 0
        %1636 = vmatprep.subr.bf16.mxu0 0
        %1637 = vmatpush1.bf16.msra.mxu0 0
        %1638 = vmatprep.subr.bf16.mxu0 0
        %1639 = vmatpush1.bf16.msra.mxu0 0
        %1640 = vmatprep.subr.bf16.mxu0 0
        %1641 = vmatpush1.bf16.msra.mxu0 0
        %1642 = vmatprep.subr.bf16.mxu0 0
        %1643 = vmatpush1.bf16.msra.mxu0 0
        %1644 = vmatprep.mubr.bf16.mxu0 0
        %1645 = vmatmul.mubr.bf16.gmra.mrb[0].mxu0 %v1610
        %v1646 = vpop.f32.mrb[0].mxu0
        %v1647 = vadd.f32 %v1602, %v1646
        %v1648 = vpop.f32.mrb[0].mxu0
        %v1649 = vpop.f32.mrb[0].mxu0
        %v1650 = vadd.f32 %v1605, %v1649
        %v1651 = vpop.f32.mrb[0].mxu0
        %1652 = vdwg.mxu0
        %v1653 = vmax.f32 %v1647, 0.0
        %v1654 = vmax.f32 %v1650, 0.0
        %v1655 = vld [vmem:[%s833] sm:$0xf]
        %v1656 = vld [vmem:[%s833 + $0x4] sm:$0xf]
        %v1657 = vld [vmem:[%s833 + $0x8] sm:$0xf]
        %v1658 = vld [vmem:[%s833 + $0xc] sm:$0xf]
        %v1659 = vld [vmem:[%s833 + $0x10] sm:$0xf]
        %v1660 = vld [vmem:[%s833 + $0x14] sm:$0xf]
        %v1661 = vld [vmem:[%s833 + $0x18] sm:$0xf]
        %v1662 = vld [vmem:[%s833 + $0x1c] sm:$0xf]
        %v1663 = vld [vmem:[%s833 + $0x20] sm:$0xf]
        %v1664 = vld [vmem:[%s833 + $0x24] sm:$0xf]
        %v1665 = vld [vmem:[%s833 + $0x28] sm:$0xf]
        %v1666 = vld [vmem:[%s833 + $0x2c] sm:$0xf]
        %v1667 = vld [vmem:[%s833 + $0x30] sm:$0xf]
        %v1668 = vld [vmem:[%s833 + $0x34] sm:$0xf]
        %v1669 = vld [vmem:[%s833 + $0x38] sm:$0xf]
        %v1670 = vld [vmem:[%s833 + $0x3c] sm:$0xf]
        %v1671 = vld [vmem:[%s928] sm:$0x1]
        %v1672 = vpack.c.bf16 %v1654, %v1653
        %v1674 = vlaneseq
        %v1675 = vshrl.u32 %v1674, 7
        %v1676 = vsub.s32 0, %v1675
        %v1677 = vrot.slane %v1671, %v1676
        %v1695 = vunpack.c.l.b16 %v1655
        %v1696 = vunpack.c.l.b16 %v1656
        %v1697 = vunpack.c.l.b16 %v1657
        %v1698 = vunpack.c.l.b16 %v1658
        %v1699 = vunpack.c.l.b16 %v1659
        %v1700 = vunpack.c.l.b16 %v1660
        %v1701 = vunpack.c.l.b16 %v1661
        %v1702 = vunpack.c.l.b16 %v1662
        %v1703 = vunpack.c.l.b16 %v1663
        %v1704 = vunpack.c.l.b16 %v1664
        %v1705 = vunpack.c.l.b16 %v1665
        %v1706 = vunpack.c.l.b16 %v1666
        %v1707 = vunpack.c.l.b16 %v1667
        %v1708 = vunpack.c.l.b16 %v1668
        %v1709 = vunpack.c.l.b16 %v1669
        %v1710 = vunpack.c.l.b16 %v1670
        %v1711 = vpack.c.b16 %v1696, %v1695
        %v1712 = vpack.c.b16 %v1698, %v1697
        %v1713 = vpack.c.b16 %v1700, %v1699
        %v1714 = vpack.c.b16 %v1702, %v1701
        %v1715 = vpack.c.b16 %v1704, %v1703
        %v1716 = vpack.c.b16 %v1706, %v1705
        %v1717 = vpack.c.b16 %v1708, %v1707
        %v1718 = vpack.c.b16 %v1710, %v1709
        %1727 = vmatprep.subr.bf16.mxu0 0
        %1728 = vmatpush1.bf16.msra.mxu0 %v1711
        %1729 = vmatprep.subr.bf16.mxu0 0
        %1730 = vmatpush1.bf16.msra.mxu0 %v1712
        %1731 = vmatprep.subr.bf16.mxu0 0
        %1732 = vmatpush1.bf16.msra.mxu0 %v1713
        %1733 = vmatprep.subr.bf16.mxu0 0
        %1734 = vmatpush1.bf16.msra.mxu0 %v1714
        %1735 = vmatprep.subr.bf16.mxu0 0
        %1736 = vmatpush1.bf16.msra.mxu0 %v1715
        %1737 = vmatprep.subr.bf16.mxu0 0
        %1738 = vmatpush1.bf16.msra.mxu0 %v1716
        %1739 = vmatprep.subr.bf16.mxu0 0
        %1740 = vmatpush1.bf16.msra.mxu0 %v1717
        %1741 = vmatprep.subr.bf16.mxu0 0
        %1742 = vmatpush1.bf16.msra.mxu0 %v1718
        %1743 = vmatprep.subr.bf16.mxu0 0
        %1744 = vmatpush1.bf16.msra.mxu0 0
        %1745 = vmatprep.subr.bf16.mxu0 0
        %1746 = vmatpush1.bf16.msra.mxu0 0
        %1747 = vmatprep.subr.bf16.mxu0 0
        %1748 = vmatpush1.bf16.msra.mxu0 0
        %1749 = vmatprep.subr.bf16.mxu0 0
        %1750 = vmatpush1.bf16.msra.mxu0 0
        %1751 = vmatprep.subr.bf16.mxu0 0
        %1752 = vmatpush1.bf16.msra.mxu0 0
        %1753 = vmatprep.subr.bf16.mxu0 0
        %1754 = vmatpush1.bf16.msra.mxu0 0
        %1755 = vmatprep.subr.bf16.mxu0 0
        %1756 = vmatpush1.bf16.msra.mxu0 0
        %1757 = vmatprep.subr.bf16.mxu0 0
        %1758 = vmatpush1.bf16.msra.mxu0 0
        %1759 = vmatprep.mubr.bf16.mxu0 0
        %1760 = vmatmul.mubr.bf16.gmra.mrb[0].mxu0 %v1672
        %v1761 = vpop.f32.mrb[0].mxu0
        %v1762 = vadd.f32 %v1677, %v1761
        %v1763 = vpop.f32.mrb[0].mxu0
        %v1764 = vpop.f32.mrb[0].mxu0
        %v1765 = vadd.f32 %v1677, %v1764
        %v1766 = vpop.f32.mrb[0].mxu0
        %1767 = vdwg.mxu0
        %v1768 = vld [vmem:[#allocation4] sm:$0xf]
        %v1769 = vpack.c.bf16 %v1765, %v1762
        %v1771 = vsel %vm1608, %v1768, 0
        %1773 = vmatprep.subr.bf16.mxu0 0
        %1774 = vmatpush1.bf16.msra.mxu0 %v1769
        %1775 = vmatprep.subr.bf16.mxu0 0
        %1776 = vmatpush1.bf16.msra.mxu0 0
        %1777 = vmatprep.subr.bf16.mxu0 0
        %1778 = vmatpush1.bf16.msra.mxu0 0
        %1779 = vmatprep.subr.bf16.mxu0 0
        %1780 = vmatpush1.bf16.msra.mxu0 0
        %1781 = vmatprep.subr.bf16.mxu0 0
        %1782 = vmatpush1.bf16.msra.mxu0 0
        %1783 = vmatprep.subr.bf16.mxu0 0
        %1784 = vmatpush1.bf16.msra.mxu0 0
        %1785 = vmatprep.subr.bf16.mxu0 0
        %1786 = vmatpush1.bf16.msra.mxu0 0
        %1787 = vmatprep.subr.bf16.mxu0 0
        %1788 = vmatpush1.bf16.msra.mxu0 0
        %1789 = vmatprep.subr.bf16.mxu0 0
        %1790 = vmatpush1.bf16.msra.mxu0 0
        %1791 = vmatprep.subr.bf16.mxu0 0
        %1792 = vmatpush1.bf16.msra.mxu0 0
        %1793 = vmatprep.subr.bf16.mxu0 0
        %1794 = vmatpush1.bf16.msra.mxu0 0
        %1795 = vmatprep.subr.bf16.mxu0 0
        %1796 = vmatpush1.bf16.msra.mxu0 0
        %1797 = vmatprep.subr.bf16.mxu0 0
        %1798 = vmatpush1.bf16.msra.mxu0 0
        %1799 = vmatprep.subr.bf16.mxu0 0
        %1800 = vmatpush1.bf16.msra.mxu0 0
        %1801 = vmatprep.subr.bf16.mxu0 0
        %1802 = vmatpush1.bf16.msra.mxu0 0
        %1803 = vmatprep.subr.bf16.mxu0 0
        %1804 = vmatpush1.bf16.msra.mxu0 0
        %1805 = vmatprep.mubr.bf16.mxu0 0
        %1806 = vmatmul.mubr.bf16.gmra.mrb[0].mxu0 %v1771
        %v1807 = vpop.f32.mrb[0].mxu0
        %v1808 = vadd.f32 0.0, %v1807
        %v1809 = vpop.f32.mrb[0].mxu0
        %v1810 = vpop.f32.mrb[0].mxu0
        %v1811 = vpop.f32.mrb[0].mxu0
        %1812 = vdwg.mxu0
        %v1813 = vld [vmem:[#allocation3] sm:$0xff]
        %1815 = vset.pattern.permute.xlu0 0
        %1816 = vperm.xlu0 %1815, %v1813
        %v1817 = vpop.permute.xlu0 %1816
        %v1819 = vmul.f32 %v1808, %v1817
        %v1820 = vld [vmem:[%s842] sm:$0xf]
        %v1821 = vld [vmem:[%s842 + $0x4] sm:$0xf]
        %v1822 = vld [vmem:[%s842 + $0x8] sm:$0xf]
        %v1823 = vld [vmem:[%s842 + $0xc] sm:$0xf]
        %v1824 = vld [vmem:[%s842 + $0x10] sm:$0xf]
        %v1825 = vld [vmem:[%s842 + $0x14] sm:$0xf]
        %v1826 = vld [vmem:[%s842 + $0x18] sm:$0xf]
        %v1827 = vld [vmem:[%s842 + $0x1c] sm:$0xf]
        %v1828 = vld [vmem:[%s842 + $0x20] sm:$0xf]
        %v1829 = vld [vmem:[%s842 + $0x24] sm:$0xf]
        %v1830 = vld [vmem:[%s842 + $0x28] sm:$0xf]
        %v1831 = vld [vmem:[%s842 + $0x2c] sm:$0xf]
        %v1832 = vld [vmem:[%s842 + $0x30] sm:$0xf]
        %v1833 = vld [vmem:[%s842 + $0x34] sm:$0xf]
        %v1834 = vld [vmem:[%s842 + $0x38] sm:$0xf]
        %v1835 = vld [vmem:[%s842 + $0x3c] sm:$0xf]
        %v1836 = vld [vmem:[%s931] sm:$0x1]
        %v1837 = vpack.c.bf16 %v1819, %v1819
        %v1839 = vlaneseq
        %v1840 = vshrl.u32 %v1839, 7
        %v1841 = vsub.s32 0, %v1840
        %v1842 = vrot.slane %v1836, %v1841
        %v1860 = vunpack.c.l.b16 %v1820
        %v1861 = vunpack.c.l.b16 %v1821
        %v1862 = vunpack.c.l.b16 %v1822
        %v1863 = vunpack.c.l.b16 %v1823
        %v1864 = vunpack.c.l.b16 %v1824
        %v1865 = vunpack.c.l.b16 %v1825
        %v1866 = vunpack.c.l.b16 %v1826
        %v1867 = vunpack.c.l.b16 %v1827
        %v1868 = vunpack.c.l.b16 %v1828
        %v1869 = vunpack.c.l.b16 %v1829
        %v1870 = vunpack.c.l.b16 %v1830
        %v1871 = vunpack.c.l.b16 %v1831
        %v1872 = vunpack.c.l.b16 %v1832
        %v1873 = vunpack.c.l.b16 %v1833
        %v1874 = vunpack.c.l.b16 %v1834
        %v1875 = vunpack.c.l.b16 %v1835
        %v1876 = vpack.c.b16 %v1861, %v1860
        %v1877 = vpack.c.b16 %v1863, %v1862
        %v1878 = vpack.c.b16 %v1865, %v1864
        %v1879 = vpack.c.b16 %v1867, %v1866
        %v1880 = vpack.c.b16 %v1869, %v1868
        %v1881 = vpack.c.b16 %v1871, %v1870
        %v1882 = vpack.c.b16 %v1873, %v1872
        %v1883 = vpack.c.b16 %v1875, %v1874
        %1892 = vmatprep.subr.bf16.mxu0 0
        %1893 = vmatpush1.bf16.msra.mxu0 %v1876
        %1894 = vmatprep.subr.bf16.mxu0 0
        %1895 = vmatpush1.bf16.msra.mxu0 %v1877
        %1896 = vmatprep.subr.bf16.mxu0 0
        %1897 = vmatpush1.bf16.msra.mxu0 %v1878
        %1898 = vmatprep.subr.bf16.mxu0 0
        %1899 = vmatpush1.bf16.msra.mxu0 %v1879
        %1900 = vmatprep.subr.bf16.mxu0 0
        %1901 = vmatpush1.bf16.msra.mxu0 %v1880
        %1902 = vmatprep.subr.bf16.mxu0 0
        %1903 = vmatpush1.bf16.msra.mxu0 %v1881
        %1904 = vmatprep.subr.bf16.mxu0 0
        %1905 = vmatpush1.bf16.msra.mxu0 %v1882
        %1906 = vmatprep.subr.bf16.mxu0 0
        %1907 = vmatpush1.bf16.msra.mxu0 %v1883
        %1908 = vmatprep.subr.bf16.mxu0 0
        %1909 = vmatpush1.bf16.msra.mxu0 0
        %1910 = vmatprep.subr.bf16.mxu0 0
        %1911 = vmatpush1.bf16.msra.mxu0 0
        %1912 = vmatprep.subr.bf16.mxu0 0
        %1913 = vmatpush1.bf16.msra.mxu0 0
        %1914 = vmatprep.subr.bf16.mxu0 0
        %1915 = vmatpush1.bf16.msra.mxu0 0
        %1916 = vmatprep.subr.bf16.mxu0 0
        %1917 = vmatpush1.bf16.msra.mxu0 0
        %1918 = vmatprep.subr.bf16.mxu0 0
        %1919 = vmatpush1.bf16.msra.mxu0 0
        %1920 = vmatprep.subr.bf16.mxu0 0
        %1921 = vmatpush1.bf16.msra.mxu0 0
        %1922 = vmatprep.subr.bf16.mxu0 0
        %1923 = vmatpush1.bf16.msra.mxu0 0
        %1924 = vmatprep.mubr.bf16.mxu0 0
        %1925 = vmatmul.mubr.bf16.gmra.mrb[0].mxu0 %v1837
        %v1926 = vpop.f32.mrb[0].mxu0
        %v1927 = vadd.f32 %v1842, %v1926
        %v1928 = vpop.f32.mrb[0].mxu0
        %v1929 = vpop.f32.mrb[0].mxu0
        %v1930 = vpop.f32.mrb[0].mxu0
        %1931 = vdwg.mxu0
        %v1932 = vmax.f32 %v1927, 0.0
        %1933 = vst [vmem:[#allocation2] sm:$0xff] %v1932
        %p1934 = scmp.eq.s32.totalorder %s37, 1
        // Predicated region
        $region157: #{tpu_custom_call.1} parent=99 // pred_check
          %p1935 = pneg %p1934
        $region158: #{tpu_custom_call.1} parent=99 // pred_check_branch
          %1937 = sbr.rel (%p1935) target = $region160
        $region159: #{tpu_custom_call.1} parent=99 // pred_region
          %v1938 = vld [vmem:[%s8] sm:$0xf]
          %v1939 = vld [vmem:[%s8 + $0x4] sm:$0xf]
          %v1940 = vld [vmem:[%s8 + $0x8] sm:$0xf]
          %v1941 = vld [vmem:[%s8 + $0xc] sm:$0xf]
          %v1942 = vld [vmem:[%s8 + $0x10] sm:$0xf]
          %v1943 = vld [vmem:[%s8 + $0x14] sm:$0xf]
          %v1944 = vld [vmem:[%s8 + $0x18] sm:$0xf]
          %v1945 = vld [vmem:[%s8 + $0x1c] sm:$0xf]
          %v1946 = vld [vmem:[%s8 + $0x20] sm:$0xf]
          %v1947 = vld [vmem:[%s8 + $0x24] sm:$0xf]
          %v1948 = vld [vmem:[%s8 + $0x28] sm:$0xf]
          %v1949 = vld [vmem:[%s8 + $0x2c] sm:$0xf]
          %v1950 = vld [vmem:[%s8 + $0x30] sm:$0xf]
          %v1951 = vld [vmem:[%s8 + $0x34] sm:$0xf]
          %v1952 = vld [vmem:[%s8 + $0x38] sm:$0xf]
          %v1953 = vld [vmem:[%s8 + $0x3c] sm:$0xf]
          %v1954 = vld [vmem:[#allocation18] sm:$0x1]
          %v1955 = vpack.c.bf16 %v1932, %v1932
          %v1957 = vlaneseq
          %v1958 = vshrl.u32 %v1957, 7
          %v1959 = vsub.s32 0, %v1958
          %v1960 = vrot.slane %v1954, %v1959
          %v1978 = vunpack.c.l.b16 %v1938
          %v1979 = vunpack.c.l.b16 %v1939
          %v1980 = vunpack.c.l.b16 %v1940
          %v1981 = vunpack.c.l.b16 %v1941
          %v1982 = vunpack.c.l.b16 %v1942
          %v1983 = vunpack.c.l.b16 %v1943
          %v1984 = vunpack.c.l.b16 %v1944
          %v1985 = vunpack.c.l.b16 %v1945
          %v1986 = vunpack.c.l.b16 %v1946
          %v1987 = vunpack.c.l.b16 %v1947
          %v1988 = vunpack.c.l.b16 %v1948
          %v1989 = vunpack.c.l.b16 %v1949
          %v1990 = vunpack.c.l.b16 %v1950
          %v1991 = vunpack.c.l.b16 %v1951
          %v1992 = vunpack.c.l.b16 %v1952
          %v1993 = vunpack.c.l.b16 %v1953
          %v1994 = vpack.c.b16 %v1979, %v1978
          %v1995 = vpack.c.b16 %v1981, %v1980
          %v1996 = vpack.c.b16 %v1983, %v1982
          %v1997 = vpack.c.b16 %v1985, %v1984
          %v1998 = vpack.c.b16 %v1987, %v1986
          %v1999 = vpack.c.b16 %v1989, %v1988
          %v2000 = vpack.c.b16 %v1991, %v1990
          %v2001 = vpack.c.b16 %v1993, %v1992
          %2010 = vmatprep.subr.bf16.mxu0 0
          %2011 = vmatpush1.bf16.msra.mxu0 %v1994
          %2012 = vmatprep.subr.bf16.mxu0 0
          %2013 = vmatpush1.bf16.msra.mxu0 %v1995
          %2014 = vmatprep.subr.bf16.mxu0 0
          %2015 = vmatpush1.bf16.msra.mxu0 %v1996
          %2016 = vmatprep.subr.bf16.mxu0 0
          %2017 = vmatpush1.bf16.msra.mxu0 %v1997
          %2018 = vmatprep.subr.bf16.mxu0 0
          %2019 = vmatpush1.bf16.msra.mxu0 %v1998
          %2020 = vmatprep.subr.bf16.mxu0 0
          %2021 = vmatpush1.bf16.msra.mxu0 %v1999
          %2022 = vmatprep.subr.bf16.mxu0 0
          %2023 = vmatpush1.bf16.msra.mxu0 %v2000
          %2024 = vmatprep.subr.bf16.mxu0 0
          %2025 = vmatpush1.bf16.msra.mxu0 %v2001
          %2026 = vmatprep.subr.bf16.mxu0 0
          %2027 = vmatpush1.bf16.msra.mxu0 0
          %2028 = vmatprep.subr.bf16.mxu0 0
          %2029 = vmatpush1.bf16.msra.mxu0 0
          %2030 = vmatprep.subr.bf16.mxu0 0
          %2031 = vmatpush1.bf16.msra.mxu0 0
          %2032 = vmatprep.subr.bf16.mxu0 0
          %2033 = vmatpush1.bf16.msra.mxu0 0
          %2034 = vmatprep.subr.bf16.mxu0 0
          %2035 = vmatpush1.bf16.msra.mxu0 0
          %2036 = vmatprep.subr.bf16.mxu0 0
          %2037 = vmatpush1.bf16.msra.mxu0 0
          %2038 = vmatprep.subr.bf16.mxu0 0
          %2039 = vmatpush1.bf16.msra.mxu0 0
          %2040 = vmatprep.subr.bf16.mxu0 0
          %2041 = vmatpush1.bf16.msra.mxu0 0
          %2042 = vmatprep.mubr.bf16.mxu0 0
          %2043 = vmatmul.mubr.bf16.gmra.mrb[0].mxu0 %v1955
          %v2044 = vpop.f32.mrb[0].mxu0
          %v2045 = vadd.f32 %v1960, %v2044
          %v2046 = vpop.f32.mrb[0].mxu0
          %v2047 = vpop.f32.mrb[0].mxu0
          %v2048 = vpop.f32.mrb[0].mxu0
          %2049 = vdwg.mxu0
          %v2050 = vmax.f32 %v2045, 0.0
          %v2051 = vld [vmem:[#allocation19] sm:$0xf]
          %v2052 = vld [vmem:[#allocation19 + $0x4] sm:$0xf]
          %v2053 = vld [vmem:[#allocation19 + $0x8] sm:$0xf]
          %v2054 = vld [vmem:[#allocation19 + $0xc] sm:$0xf]
          %v2055 = vld [vmem:[#allocation19 + $0x10] sm:$0xf]
          %v2056 = vld [vmem:[#allocation19 + $0x14] sm:$0xf]
          %v2057 = vld [vmem:[#allocation19 + $0x18] sm:$0xf]
          %v2058 = vld [vmem:[#allocation19 + $0x1c] sm:$0xf]
          %v2059 = vld [vmem:[#allocation19 + $0x20] sm:$0xf]
          %v2060 = vld [vmem:[#allocation19 + $0x24] sm:$0xf]
          %v2061 = vld [vmem:[#allocation19 + $0x28] sm:$0xf]
          %v2062 = vld [vmem:[#allocation19 + $0x2c] sm:$0xf]
          %v2063 = vld [vmem:[#allocation19 + $0x30] sm:$0xf]
          %v2064 = vld [vmem:[#allocation19 + $0x34] sm:$0xf]
          %v2065 = vld [vmem:[#allocation19 + $0x38] sm:$0xf]
          %v2066 = vld [vmem:[#allocation19 + $0x3c] sm:$0xf]
          %v2067 = vld [vmem:[%s11] sm:$0x1]
          %v2068 = vpack.c.bf16 %v2050, %v2050
          %v2070 = vlaneseq
          %v2071 = vshrl.u32 %v2070, 7
          %v2072 = vsub.s32 0, %v2071
          %v2073 = vrot.slane %v2067, %v2072
          %v2091 = vunpack.c.l.b16 %v2051
          %v2092 = vunpack.c.l.b16 %v2052
          %v2093 = vunpack.c.l.b16 %v2053
          %v2094 = vunpack.c.l.b16 %v2054
          %v2095 = vunpack.c.l.b16 %v2055
          %v2096 = vunpack.c.l.b16 %v2056
          %v2097 = vunpack.c.l.b16 %v2057
          %v2098 = vunpack.c.l.b16 %v2058
          %v2099 = vunpack.c.l.b16 %v2059
          %v2100 = vunpack.c.l.b16 %v2060
          %v2101 = vunpack.c.l.b16 %v2061
          %v2102 = vunpack.c.l.b16 %v2062
          %v2103 = vunpack.c.l.b16 %v2063
          %v2104 = vunpack.c.l.b16 %v2064
          %v2105 = vunpack.c.l.b16 %v2065
          %v2106 = vunpack.c.l.b16 %v2066
          %v2107 = vpack.c.b16 %v2092, %v2091
          %v2108 = vpack.c.b16 %v2094, %v2093
          %v2109 = vpack.c.b16 %v2096, %v2095
          %v2110 = vpack.c.b16 %v2098, %v2097
          %v2111 = vpack.c.b16 %v2100, %v2099
          %v2112 = vpack.c.b16 %v2102, %v2101
          %v2113 = vpack.c.b16 %v2104, %v2103
          %v2114 = vpack.c.b16 %v2106, %v2105
          %2123 = vmatprep.subr.bf16.mxu0 0
          %2124 = vmatpush1.bf16.msra.mxu0 %v2107
          %2125 = vmatprep.subr.bf16.mxu0 0
          %2126 = vmatpush1.bf16.msra.mxu0 %v2108
          %2127 = vmatprep.subr.bf16.mxu0 0
          %2128 = vmatpush1.bf16.msra.mxu0 %v2109
          %2129 = vmatprep.subr.bf16.mxu0 0
          %2130 = vmatpush1.bf16.msra.mxu0 %v2110
          %2131 = vmatprep.subr.bf16.mxu0 0
          %2132 = vmatpush1.bf16.msra.mxu0 %v2111
          %2133 = vmatprep.subr.bf16.mxu0 0
          %2134 = vmatpush1.bf16.msra.mxu0 %v2112
          %2135 = vmatprep.subr.bf16.mxu0 0
          %2136 = vmatpush1.bf16.msra.mxu0 %v2113
          %2137 = vmatprep.subr.bf16.mxu0 0
          %2138 = vmatpush1.bf16.msra.mxu0 %v2114
          %2139 = vmatprep.subr.bf16.mxu0 0
          %2140 = vmatpush1.bf16.msra.mxu0 0
          %2141 = vmatprep.subr.bf16.mxu0 0
          %2142 = vmatpush1.bf16.msra.mxu0 0
          %2143 = vmatprep.subr.bf16.mxu0 0
          %2144 = vmatpush1.bf16.msra.mxu0 0
          %2145 = vmatprep.subr.bf16.mxu0 0
          %2146 = vmatpush1.bf16.msra.mxu0 0
          %2147 = vmatprep.subr.bf16.mxu0 0
          %2148 = vmatpush1.bf16.msra.mxu0 0
          %2149 = vmatprep.subr.bf16.mxu0 0
          %2150 = vmatpush1.bf16.msra.mxu0 0
          %2151 = vmatprep.subr.bf16.mxu0 0
          %2152 = vmatpush1.bf16.msra.mxu0 0
          %2153 = vmatprep.subr.bf16.mxu0 0
          %2154 = vmatpush1.bf16.msra.mxu0 0
          %2155 = vmatprep.mubr.bf16.mxu0 0
          %2156 = vmatmul.mubr.bf16.gmra.mrb[0].mxu0 %v2068
          %v2157 = vpop.f32.mrb[0].mxu0
          %v2158 = vadd.f32 %v2073, %v2157
          %v2159 = vpop.f32.mrb[0].mxu0
          %v2160 = vpop.f32.mrb[0].mxu0
          %v2161 = vpop.f32.mrb[0].mxu0
          %2162 = vdwg.mxu0
          %2163 = vst [vmem:[#allocation26] sm:$0xff] %v2158
        $region160: #{tpu_custom_call.1} parent=99 // pred_fallthru
          _
        // Predicated region
        $region161: #{tpu_custom_call.1} parent=99 // pred_check
          %p2164 = pneg %p510
        $region162: #{tpu_custom_call.1} parent=99 // pred_check_branch
          %2166 = sbr.rel (%p2164) target = $region164
        $region163: #{tpu_custom_call.1} parent=99 // pred_region
          %s2168 = ssub.s32 128, 128
          %2169 = vsyncadd [#allocation9], %s2168
          %s2171 = sshll.u32 [#allocation26], 4
          %s2172 = int_to_ptr.vmem [resolvable:$true] %s2171
          %2174 = dma.vmem_to_hbm [thread:$0]  %s2172, 128, %s20, [#allocation9]
        $region164: #{tpu_custom_call.1} parent=99 // pred_fallthru
          _
        // Predicated region
        $region165: #{tpu_custom_call.1} parent=99 // pred_check
          %p2175 = pneg %p510
        $region166: #{tpu_custom_call.1} parent=99 // pred_check_branch
          %2177 = sbr.rel (%p2175) target = $region168
        $region167: #{tpu_custom_call.1} parent=99 // pred_region
          %2178 = dma.done [#allocation9], 128
        $region168: #{tpu_custom_call.1} parent=99 // pred_fallthru
          _
      $region100: #{tpu_custom_call.1} parent=5 // pred_fallthru
        _
      %p2179 = scmp.le.s32.totalorder 2, %s32
      // Predicated region
      $region169: #{tpu_custom_call.1} parent=5 // pred_check
        %p2180 = pneg %p2179
      $region170: #{tpu_custom_call.1} parent=5 // pred_check_branch
        %2182 = sbr.rel (%p2180) target = $region172
      $region171: #{tpu_custom_call.1} parent=5 // pred_region
        %s2183 = ssub.s32 %s32, 2
      $region172: #{tpu_custom_call.1} parent=5 // pred_fallthru
        _
    $region6: #{tpu_custom_call.1} parent=1 // loop_footer
      %s36 = sadd.s32 1, %s32
    $region7: #{tpu_custom_call.1} parent=1 // loop_footer_branch
      %31 = sbr.rel target = $region3
    $region8: #{tpu_custom_call.1} parent=1 // loop_exit
      _
    %2184 = vsyncpa [#allocation8], 1
    %s2185 = scalar_lea.sflag [#allocation8], 1
    %2186 = vsyncpa %s2185, 1
    %2187 = vsyncpa [#allocation11], 1
    %2188 = vsyncpa [#allocation14], 1
    %2189 = vsyncpa [#allocation17], 1
    %2190 = vsyncpa [#allocation20], 1
    %2191 = vsyncpa [#allocation9], 1
    %s2192 = scalar_lea.sflag [#allocation9], 1
    %2193 = vsyncpa %s2192, 1

</llo_original>
